<compile_context>
chip_gen: v7x
topology: tpu7x:2x2x1
jax: 0.10.0
libtpu: 0.0.40
codegen_flags: <defaults>
</compile_context>

<pallas_src>
import math

import jax
import jax.numpy as jnp
from jax.experimental import pallas as pl
from jax.experimental.pallas import tpu as pltpu

_LN_EPS = 1e-5  # torch.nn.LayerNorm default


def _round_up(x, m):
    return (x + m - 1) // m * m


def _layernorm_f32(x, gamma, beta):
    mean = jnp.mean(x, axis=-1, keepdims=True)
    var = jnp.mean(jnp.square(x - mean), axis=-1, keepdims=True)
    return (x - mean) * jax.lax.rsqrt(var + _LN_EPS) * gamma + beta


# ----------------------------- PreNorm + FeedForward + residual -----------------------------

def _prenorm_ff_kernel(x_ref, g_ref, bt_ref, w1_ref, b1_ref, w2_ref, b2_ref, o_ref):
    # x_ref: (TM, dim); weights resident across the whole grid.
    x = x_ref[...].astype(jnp.float32)
    xn = _layernorm_f32(x, g_ref[...].astype(jnp.float32), bt_ref[...].astype(jnp.float32))
    h = jnp.dot(xn.astype(w1_ref.dtype), w1_ref[...], preferred_element_type=jnp.float32)
    h = h + b1_ref[...].astype(jnp.float32)
    h = jax.nn.gelu(h, approximate=False)          # torch nn.GELU default = exact erf GELU
    # Dropout layers are identity in eval mode.
    y = jnp.dot(h.astype(w2_ref.dtype), w2_ref[...], preferred_element_type=jnp.float32)
    y = y + b2_ref[...].astype(jnp.float32)
    o_ref[...] = (y + x).astype(o_ref.dtype)       # residual (x = ff(x) + x)


def prenorm_feedforward_residual(x, p, *, tm=256):
    """x: (batch, seq, dim) -> (batch, seq, dim). Computes PreNorm(FeedForward)(x) + x."""
    b, n, dim = x.shape
    hidden = p["w1"].shape[1]
    M = b * n
    x2 = x.reshape(M, dim)

    TM = min(tm, _round_up(M, 8))                  # multiple of 8, capped by (padded) M
    Mp = _round_up(M, TM)
    if Mp != M:
        x2 = jnp.pad(x2, ((0, Mp - M), (0, 0)))    # ragged-tail padding (sliced off below)

    xbytes = x.dtype.itemsize
    wbytes = p["w1"].dtype.itemsize
    need = (2 * 2 * TM * dim * xbytes                    # double-buffered x + out tiles
            + (dim * hidden + hidden * dim) * wbytes     # resident weights
            + (hidden + 3 * dim) * wbytes                # biases + LN params
            + TM * (hidden + 2 * dim) * 4)               # f32 intermediates
    vmem_limit = int(min(64 * 1024 * 1024, max(32 * 1024 * 1024, 2 * need)))

    rep = lambda a: a.reshape(1, -1)
    out = pl.pallas_call(
        _prenorm_ff_kernel,
        out_shape=jax.ShapeDtypeStruct((Mp, dim), x.dtype),
        grid=(Mp // TM,),
        in_specs=[
            pl.BlockSpec((TM, dim), lambda i: (i, 0)),       # x tile (streamed)
            pl.BlockSpec((1, dim), lambda i: (0, 0)),        # LN gamma (resident)
            pl.BlockSpec((1, dim), lambda i: (0, 0)),        # LN beta
            pl.BlockSpec((dim, hidden), lambda i: (0, 0)),   # w1 (resident)
            pl.BlockSpec((1, hidden), lambda i: (0, 0)),     # b1
            pl.BlockSpec((hidden, dim), lambda i: (0, 0)),   # w2 (resident)
            pl.BlockSpec((1, dim), lambda i: (0, 0)),        # b2
        ],
        out_specs=pl.BlockSpec((TM, dim), lambda i: (i, 0)),
        compiler_params=pltpu.CompilerParams(
            dimension_semantics=("parallel",),
            vmem_limit_bytes=vmem_limit),
        cost_estimate=pl.CostEstimate(
            flops=int(4 * Mp * dim * hidden),
            transcendentals=int(Mp * hidden),
            bytes_accessed=int(2 * Mp * dim * xbytes + 2 * dim * hidden * wbytes)),
    )(x2, rep(p["ln_g"]), rep(p["ln_b"]), p["w1"], rep(p["b1"]), p["w2"], rep(p["b2"]))

    if Mp != M:
        out = out[:M]
    return out.reshape(b, n, dim)


# --------------------------- PreNorm + c_Attention + residual -------------------------------

def _make_prenorm_attn_kernel(heads, dim_head):
    inv_dk = 1.0 / math.sqrt(dim_head)
    inner = heads * dim_head

    def kernel(x_ref, g_ref, bt_ref, wqkv_ref, bqkv_ref, wo_ref, bo_ref, o_ref, attn_ref):
        x = x_ref[0].astype(jnp.float32)                          # (n, dim) for this batch
        xn = _layernorm_f32(x, g_ref[...].astype(jnp.float32),
                            bt_ref[...].astype(jnp.float32))
        xc = xn.astype(wqkv_ref.dtype)
        # Single fused QKV projection: (n, dim) @ (dim, 3*inner).
        qkv = jnp.dot(xc, wqkv_ref[...], preferred_element_type=jnp.float32) \
            + bqkv_ref[...].astype(jnp.float32)
        q = qkv[:, 0 * inner:1 * inner]
        k = qkv[:, 1 * inner:2 * inner]
        v = qkv[:, 2 * inner:3 * inner]

        probs = []
        head_outs = []
        for h in range(heads):                                    # small static unroll
            sl = slice(h * dim_head, (h + 1) * dim_head)
            qh, kh, vh = q[:, sl], k[:, sl], v[:, sl]             # (n, d)
            # dots[i, j] = <q_i, k_j> / sqrt(d)  (contract last dims; no explicit transpose)
            dots = jax.lax.dot_general(qh, kh, (((1,), (1,)), ((), ())),
                                       preferred_element_type=jnp.float32) * inv_dk
            m = jnp.max(dots, axis=-1, keepdims=True)
            e = jnp.exp(dots - m)
            p = e / jnp.sum(e, axis=-1, keepdims=True)            # softmax
            probs.append(p)
            head_outs.append(jnp.dot(p.astype(wo_ref.dtype), vh.astype(wo_ref.dtype),
                                     preferred_element_type=jnp.float32))
        # One store for the whole attention map of this batch element.
        attn_ref[0] = jnp.stack(probs, axis=0).astype(attn_ref.dtype)
        out = jnp.concatenate(head_outs, axis=-1)                 # (n, heads*dim_head)
        y = jnp.dot(out.astype(wo_ref.dtype), wo_ref[...],
                    preferred_element_type=jnp.float32) + bo_ref[...].astype(jnp.float32)
        # to_out Dropout is identity in eval mode; add residual (x = x_n + x).
        o_ref[0] = (y + x).astype(o_ref.dtype)

    return kernel


def prenorm_attention_residual(x, p, *, heads, dim_head):
    """x: (batch, seq, dim) -> (PreNorm(c_Attention)(x) + x, attention map)."""
    b, n, dim = x.shape
    inner = heads * dim_head
    kernel = _make_prenorm_attn_kernel(heads, dim_head)
    rep = lambda a: a.reshape(1, -1)

    # Fuse Q/K/V projection weights so the kernel does a single (dim, 3*inner) matmul.
    wqkv = jnp.concatenate([p["wq"], p["wk"], p["wv"]], axis=1)   # (dim, 3*inner)
    bqkv = jnp.concatenate([p["bq"], p["bk"], p["bv"]], axis=0)   # (3*inner,)

    xbytes = x.dtype.itemsize
    wbytes = wqkv.dtype.itemsize
    need = (2 * 2 * n * dim * xbytes                       # double-buffered x + out tiles
            + 2 * heads * n * n * 4                        # attn map tiles
            + (dim * 3 * inner + inner * dim) * wbytes     # resident weights
            + (3 * inner + 3 * dim) * wbytes               # biases + LN params
            + n * (3 * inner + inner + dim) * 4)           # f32 intermediates
    vmem_limit = int(min(64 * 1024 * 1024, max(32 * 1024 * 1024, 2 * need)))

    out, attn = pl.pallas_call(
        kernel,
        out_shape=(jax.ShapeDtypeStruct((b, n, dim), x.dtype),
                   jax.ShapeDtypeStruct((b, heads, n, n), jnp.float32)),
        grid=(b,),
        in_specs=[
            pl.BlockSpec((1, n, dim), lambda i: (i, 0, 0)),        # x (one batch per step)
            pl.BlockSpec((1, dim), lambda i: (0, 0)),              # LN gamma (resident)
            pl.BlockSpec((1, dim), lambda i: (0, 0)),              # LN beta
            pl.BlockSpec((dim, 3 * inner), lambda i: (0, 0)),      # fused wqkv (resident)
            pl.BlockSpec((1, 3 * inner), lambda i: (0, 0)),        # fused bqkv
            pl.BlockSpec((inner, dim), lambda i: (0, 0)),          # wo
            pl.BlockSpec((1, dim), lambda i: (0, 0)),              # bo
        ],
        out_specs=(pl.BlockSpec((1, n, dim), lambda i: (i, 0, 0)),
                   pl.BlockSpec((1, heads, n, n), lambda i: (i, 0, 0, 0))),
        compiler_params=pltpu.CompilerParams(
            dimension_semantics=("parallel",),
            vmem_limit_bytes=vmem_limit),
        cost_estimate=pl.CostEstimate(
            flops=int(b * (2 * n * dim * 3 * inner          # qkv proj
                           + 4 * heads * n * n * dim_head   # q·k^T and p·v
                           + 2 * n * inner * dim)),         # out proj
            transcendentals=int(b * heads * n * n),
            bytes_accessed=int(2 * b * n * dim * xbytes + b * heads * n * n * 4
                               + 4 * dim * inner * wbytes)),
    )(x, rep(p["ln_g"]), rep(p["ln_b"]), wqkv, rep(bqkv), p["wo"], rep(p["bo"]))
    return out, attn


# ------------------------------------ full transformer --------------------------------------

def c_transformer_forward(x, layers, *, heads, dim_head, tm=256):
    """Pallas forward of c_Transformer (eval mode). Returns (x, attn map of last layer)."""
    attn = None
    for layer in layers:
        x, attn = prenorm_attention_residual(x, layer["attn"], heads=heads, dim_head=dim_head)
        x = prenorm_feedforward_residual(x, layer["ff"], tm=tm)
    return x, attn


def init_transformer_params(key, *, dim, depth, heads, dim_head, mlp_dim, dtype=jnp.float32):
    """nn.Linear-style uniform(-1/sqrt(fan_in), 1/sqrt(fan_in)); weights stored (in, out)."""
    inner = heads * dim_head

    def linear(kw, kb, fan_in, fan_out):
        bound = 1.0 / math.sqrt(fan_in)
        w = jax.random.uniform(kw, (fan_in, fan_out), dtype, -bound, bound)
        b = jax.random.uniform(kb, (fan_out,), dtype, -bound, bound)
        return w, b

    layers = []
    for _ in range(depth):
        key, *ks = jax.random.split(key, 13)
        wq, bq = linear(ks[0], ks[1], dim, inner)
        wk, bk = linear(ks[2], ks[3], dim, inner)
        wv, bv = linear(ks[4], ks[5], dim, inner)
        wo, bo = linear(ks[6], ks[7], inner, dim)
        w1, b1 = linear(ks[8], ks[9], dim, mlp_dim)
        w2, b2 = linear(ks[10], ks[11], mlp_dim, dim)
        layers.append({
            "attn": {"ln_g": jnp.ones((dim,), dtype), "ln_b": jnp.zeros((dim,), dtype),
                     "wq": wq, "bq": bq, "wk": wk, "bk": bk, "wv": wv, "bv": bv,
                     "wo": wo, "bo": bo},
            "ff": {"ln_g": jnp.ones((dim,), dtype), "ln_b": jnp.zeros((dim,), dtype),
                   "w1": w1, "b1": b1, "w2": w2, "b2": b2},
        })
    return layers


def c_transformer_ref(x, layers, *, heads, dim_head):
    """Pure-JAX reference mirroring the PyTorch forward (eval mode)."""
    def ln(t, g, b):
        m = jnp.mean(t, axis=-1, keepdims=True)
        v = jnp.mean(jnp.square(t - m), axis=-1, keepdims=True)
        return (t - m) * jax.lax.rsqrt(v + _LN_EPS) * g + b

    bsz, n, _ = x.shape
    attn = None
    for layer in layers:
        a = layer["attn"]
        xn = ln(x, a["ln_g"], a["ln_b"])
        q = xn @ a["wq"] + a["bq"]
        k = xn @ a["wk"] + a["bk"]
        v = xn @ a["wv"] + a["bv"]
        split = lambda t: t.reshape(bsz, n, heads, dim_head).transpose(0, 2, 1, 3)
        qh, kh, vh = split(q), split(k), split(v)
        dots = jnp.einsum("bhid,bhjd->bhij", qh, kh) / math.sqrt(dim_head)
        attn = jax.nn.softmax(dots, axis=-1)
        o = jnp.einsum("bhij,bhjd->bhid", attn, vh)
        o = o.transpose(0, 2, 1, 3).reshape(bsz, n, heads * dim_head)
        x = o @ a["wo"] + a["bo"] + x
        f = layer["ff"]
        xn = ln(x, f["ln_g"], f["ln_b"])
        h = jax.nn.gelu(xn @ f["w1"] + f["b1"], approximate=False)
        x = h @ f["w2"] + f["b2"] + x
    return x, attn


if __name__ == "__main__":
    batch, seq, dim = 2, 8, 32
    depth, heads, dim_head, mlp_dim = 2, 4, 8, 64

    key = jax.random.PRNGKey(0)
    kx, kp = jax.random.split(key)
    x = jax.random.normal(kx, (batch, seq, dim), jnp.float32)
    params = init_transformer_params(kp, dim=dim, depth=depth, heads=heads,
                                     dim_head=dim_head, mlp_dim=mlp_dim, dtype=jnp.float32)

    # f32 weights: check against the pure-JAX reference.
    out, attn = c_transformer_forward(x, params, heads=heads, dim_head=dim_head)
    out = jax.block_until_ready(out)
    attn = jax.block_until_ready(attn)
    ref_out, ref_attn = c_transformer_ref(x, params, heads=heads, dim_head=dim_head)

    assert out.shape == (batch, seq, dim)
    assert attn.shape == (batch, heads, seq, seq)
    assert jnp.allclose(out, ref_out, rtol=5e-3, atol=5e-3), "f32 output mismatch"
    assert jnp.allclose(attn, ref_attn, rtol=5e-3, atol=5e-3), "f32 attn-map mismatch"

    # bf16 weights (MXU-native) with f32 accumulation: looser tolerance vs the f32 reference.
    params_bf16 = jax.tree_util.tree_map(lambda a: a.astype(jnp.bfloat16), params)
    out16, attn16 = c_transformer_forward(x, params_bf16, heads=heads, dim_head=dim_head)
    out16 = jax.block_until_ready(out16)
    assert jnp.allclose(out16, ref_out, rtol=5e-2, atol=2e-1), "bf16 output mismatch"
    assert jnp.allclose(attn16, ref_attn, rtol=5e-2, atol=1e-1), "bf16 attn-map mismatch"

    print("KERNEL_OK")
</pallas_src>

<mosaic_0001>
module attributes {stable_mosaic.version = 11 : i64} {
  func.func @kernel(%arg0: i32, %arg1: memref<1x8x32xf32, #tpu.memory_space<vmem>>, %arg2: memref<1x32xf32, #tpu.memory_space<vmem>>, %arg3: memref<1x32xf32, #tpu.memory_space<vmem>>, %arg4: memref<32x96xf32, #tpu.memory_space<vmem>>, %arg5: memref<1x96xf32, #tpu.memory_space<vmem>>, %arg6: memref<32x32xf32, #tpu.memory_space<vmem>>, %arg7: memref<1x32xf32, #tpu.memory_space<vmem>>, %arg8: memref<1x8x32xf32, #tpu.memory_space<vmem>>, %arg9: memref<1x4x8x8xf32, #tpu.memory_space<vmem>>) attributes {dimension_semantics = [#tpu.dimension_semantics<parallel>], iteration_bounds = array<i64: 2>, scalar_prefetch = 0 : i64, scratch_operands = 0 : i64, tpu.core_type = #tpu.core_type<tc>, window_params = [{transform_indices = @transform_0, window_bounds = array<i64: 1, 8, 32>}, {pipeline_mode = #tpu.pipeline_mode<synchronous>, transform_indices = @transform_1, window_bounds = array<i64: 1, 32>}, {pipeline_mode = #tpu.pipeline_mode<synchronous>, transform_indices = @transform_2, window_bounds = array<i64: 1, 32>}, {pipeline_mode = #tpu.pipeline_mode<synchronous>, transform_indices = @transform_3, window_bounds = array<i64: 32, 96>}, {pipeline_mode = #tpu.pipeline_mode<synchronous>, transform_indices = @transform_4, window_bounds = array<i64: 1, 96>}, {pipeline_mode = #tpu.pipeline_mode<synchronous>, transform_indices = @transform_5, window_bounds = array<i64: 32, 32>}, {pipeline_mode = #tpu.pipeline_mode<synchronous>, transform_indices = @transform_6, window_bounds = array<i64: 1, 32>}, {transform_indices = @transform_7, window_bounds = array<i64: 1, 8, 32>}, {transform_indices = @transform_8, window_bounds = array<i64: 1, 4, 8, 8>}]} {
    %c0 = arith.constant 0 : index
    %c0_0 = arith.constant 0 : index
    %c0_1 = arith.constant 0 : index
    %0 = vector.load %arg1[%c0, %c0_0, %c0_1] : memref<1x8x32xf32, #tpu.memory_space<vmem>>, vector<1x8x32xf32>
    %1 = vector.shape_cast %0 : vector<1x8x32xf32> to vector<8x32xf32>
    %c0_2 = arith.constant 0 : index
    %c0_3 = arith.constant 0 : index
    %2 = vector.load %arg2[%c0_2, %c0_3] : memref<1x32xf32, #tpu.memory_space<vmem>>, vector<1x32xf32>
    %c0_4 = arith.constant 0 : index
    %c0_5 = arith.constant 0 : index
    %3 = vector.load %arg3[%c0_4, %c0_5] : memref<1x32xf32, #tpu.memory_space<vmem>>, vector<1x32xf32>
    %cst = arith.constant dense<0.000000e+00> : vector<8xf32>
    %4 = vector.multi_reduction <add>, %1, %cst [1] : vector<8x32xf32> to vector<8xf32>
    %5 = vector.shape_cast %4 : vector<8xf32> to vector<8x1xf32>
    %cst_6 = arith.constant 3.200000e+01 : f32
    %6 = vector.broadcast %cst_6 : f32 to vector<8x1xf32>
    %7 = arith.divf %5, %6 : vector<8x1xf32>
    %8 = vector.broadcast %7 : vector<8x1xf32> to vector<8x32xf32>
    %9 = arith.subf %1, %8 : vector<8x32xf32>
    %10 = arith.mulf %9, %9 : vector<8x32xf32>
    %cst_7 = arith.constant dense<0.000000e+00> : vector<8xf32>
    %11 = vector.multi_reduction <add>, %10, %cst_7 [1] : vector<8x32xf32> to vector<8xf32>
    %12 = vector.shape_cast %11 : vector<8xf32> to vector<8x1xf32>
    %cst_8 = arith.constant 3.200000e+01 : f32
    %13 = vector.broadcast %cst_8 : f32 to vector<8x1xf32>
    %14 = arith.divf %12, %13 : vector<8x1xf32>
    %15 = vector.broadcast %7 : vector<8x1xf32> to vector<8x32xf32>
    %16 = arith.subf %1, %15 : vector<8x32xf32>
    %cst_9 = arith.constant 9.99999974E-6 : f32
    %17 = vector.broadcast %cst_9 : f32 to vector<8x1xf32>
    %18 = arith.addf %14, %17 : vector<8x1xf32>
    %19 = math.rsqrt %18 : vector<8x1xf32>
    %20 = vector.broadcast %19 : vector<8x1xf32> to vector<8x32xf32>
    %21 = arith.mulf %16, %20 : vector<8x32xf32>
    %22 = vector.broadcast %2 : vector<1x32xf32> to vector<8x32xf32>
    %23 = arith.mulf %21, %22 : vector<8x32xf32>
    %24 = vector.broadcast %3 : vector<1x32xf32> to vector<8x32xf32>
    %25 = arith.addf %23, %24 : vector<8x32xf32>
    %c0_10 = arith.constant 0 : index
    %c0_11 = arith.constant 0 : index
    %26 = vector.load %arg4[%c0_10, %c0_11] : memref<32x96xf32, #tpu.memory_space<vmem>>, vector<32x96xf32>
    %cst_12 = arith.constant dense<0.000000e+00> : vector<8x96xf32>
    %27 = tpu.matmul %25, %26, %cst_12 {dimension_numbers = #tpu.dot_dimension_numbers<[1], [0], [0], [1], [0, 0, 1, 1], [], []>} : vector<8x32xf32>, vector<32x96xf32>, vector<8x96xf32> -> vector<8x96xf32>
    %c0_13 = arith.constant 0 : index
    %c0_14 = arith.constant 0 : index
    %28 = vector.load %arg5[%c0_13, %c0_14] : memref<1x96xf32, #tpu.memory_space<vmem>>, vector<1x96xf32>
    %29 = vector.broadcast %28 : vector<1x96xf32> to vector<8x96xf32>
    %30 = arith.addf %27, %29 : vector<8x96xf32>
    %31 = vector.extract_strided_slice %30 {offsets = [0, 0], sizes = [8, 32], strides = [1, 1]} : vector<8x96xf32> to vector<8x32xf32>
    %32 = vector.extract_strided_slice %30 {offsets = [0, 32], sizes = [8, 32], strides = [1, 1]} : vector<8x96xf32> to vector<8x32xf32>
    %33 = vector.extract_strided_slice %30 {offsets = [0, 64], sizes = [8, 32], strides = [1, 1]} : vector<8x96xf32> to vector<8x32xf32>
    %34 = vector.extract_strided_slice %31 {offsets = [0, 0], sizes = [8, 8], strides = [1, 1]} : vector<8x32xf32> to vector<8x8xf32>
    %35 = vector.extract_strided_slice %32 {offsets = [0, 0], sizes = [8, 8], strides = [1, 1]} : vector<8x32xf32> to vector<8x8xf32>
    %36 = vector.extract_strided_slice %33 {offsets = [0, 0], sizes = [8, 8], strides = [1, 1]} : vector<8x32xf32> to vector<8x8xf32>
    %cst_15 = arith.constant dense<0.000000e+00> : vector<8x8xf32>
    %37 = tpu.matmul %34, %35, %cst_15 {dimension_numbers = #tpu.dot_dimension_numbers<[1], [1], [0], [0], [0, 0, 1, 0], [], []>} : vector<8x8xf32>, vector<8x8xf32>, vector<8x8xf32> -> vector<8x8xf32>
    %cst_16 = arith.constant 0.353553385 : f32
    %38 = vector.broadcast %cst_16 : f32 to vector<8x8xf32>
    %39 = arith.mulf %37, %38 : vector<8x8xf32>
    %cst_17 = arith.constant dense<0xFF800000> : vector<8xf32>
    %40 = vector.multi_reduction <maximumf>, %39, %cst_17 [1] : vector<8x8xf32> to vector<8xf32>
    %41 = vector.shape_cast %40 : vector<8xf32> to vector<8x1xf32>
    %42 = vector.broadcast %41 : vector<8x1xf32> to vector<8x8xf32>
    %43 = arith.subf %39, %42 : vector<8x8xf32>
    %44 = math.exp %43 : vector<8x8xf32>
    %cst_18 = arith.constant dense<0.000000e+00> : vector<8xf32>
    %45 = vector.multi_reduction <add>, %44, %cst_18 [1] : vector<8x8xf32> to vector<8xf32>
    %46 = vector.shape_cast %45 : vector<8xf32> to vector<8x1xf32>
    %47 = vector.broadcast %46 : vector<8x1xf32> to vector<8x8xf32>
    %48 = arith.divf %44, %47 : vector<8x8xf32>
    %cst_19 = arith.constant dense<0.000000e+00> : vector<8x8xf32>
    %49 = tpu.matmul %48, %36, %cst_19 {dimension_numbers = #tpu.dot_dimension_numbers<[1], [0], [0], [1], [0, 0, 1, 1], [], []>} : vector<8x8xf32>, vector<8x8xf32>, vector<8x8xf32> -> vector<8x8xf32>
    %50 = vector.extract_strided_slice %31 {offsets = [0, 8], sizes = [8, 8], strides = [1, 1]} : vector<8x32xf32> to vector<8x8xf32>
    %51 = vector.extract_strided_slice %32 {offsets = [0, 8], sizes = [8, 8], strides = [1, 1]} : vector<8x32xf32> to vector<8x8xf32>
    %52 = vector.extract_strided_slice %33 {offsets = [0, 8], sizes = [8, 8], strides = [1, 1]} : vector<8x32xf32> to vector<8x8xf32>
    %cst_20 = arith.constant dense<0.000000e+00> : vector<8x8xf32>
    %53 = tpu.matmul %50, %51, %cst_20 {dimension_numbers = #tpu.dot_dimension_numbers<[1], [1], [0], [0], [0, 0, 1, 0], [], []>} : vector<8x8xf32>, vector<8x8xf32>, vector<8x8xf32> -> vector<8x8xf32>
    %cst_21 = arith.constant 0.353553385 : f32
    %54 = vector.broadcast %cst_21 : f32 to vector<8x8xf32>
    %55 = arith.mulf %53, %54 : vector<8x8xf32>
    %cst_22 = arith.constant dense<0xFF800000> : vector<8xf32>
    %56 = vector.multi_reduction <maximumf>, %55, %cst_22 [1] : vector<8x8xf32> to vector<8xf32>
    %57 = vector.shape_cast %56 : vector<8xf32> to vector<8x1xf32>
    %58 = vector.broadcast %57 : vector<8x1xf32> to vector<8x8xf32>
    %59 = arith.subf %55, %58 : vector<8x8xf32>
    %60 = math.exp %59 : vector<8x8xf32>
    %cst_23 = arith.constant dense<0.000000e+00> : vector<8xf32>
    %61 = vector.multi_reduction <add>, %60, %cst_23 [1] : vector<8x8xf32> to vector<8xf32>
    %62 = vector.shape_cast %61 : vector<8xf32> to vector<8x1xf32>
    %63 = vector.broadcast %62 : vector<8x1xf32> to vector<8x8xf32>
    %64 = arith.divf %60, %63 : vector<8x8xf32>
    %cst_24 = arith.constant dense<0.000000e+00> : vector<8x8xf32>
    %65 = tpu.matmul %64, %52, %cst_24 {dimension_numbers = #tpu.dot_dimension_numbers<[1], [0], [0], [1], [0, 0, 1, 1], [], []>} : vector<8x8xf32>, vector<8x8xf32>, vector<8x8xf32> -> vector<8x8xf32>
    %66 = vector.extract_strided_slice %31 {offsets = [0, 16], sizes = [8, 8], strides = [1, 1]} : vector<8x32xf32> to vector<8x8xf32>
    %67 = vector.extract_strided_slice %32 {offsets = [0, 16], sizes = [8, 8], strides = [1, 1]} : vector<8x32xf32> to vector<8x8xf32>
    %68 = vector.extract_strided_slice %33 {offsets = [0, 16], sizes = [8, 8], strides = [1, 1]} : vector<8x32xf32> to vector<8x8xf32>
    %cst_25 = arith.constant dense<0.000000e+00> : vector<8x8xf32>
    %69 = tpu.matmul %66, %67, %cst_25 {dimension_numbers = #tpu.dot_dimension_numbers<[1], [1], [0], [0], [0, 0, 1, 0], [], []>} : vector<8x8xf32>, vector<8x8xf32>, vector<8x8xf32> -> vector<8x8xf32>
    %cst_26 = arith.constant 0.353553385 : f32
    %70 = vector.broadcast %cst_26 : f32 to vector<8x8xf32>
    %71 = arith.mulf %69, %70 : vector<8x8xf32>
    %cst_27 = arith.constant dense<0xFF800000> : vector<8xf32>
    %72 = vector.multi_reduction <maximumf>, %71, %cst_27 [1] : vector<8x8xf32> to vector<8xf32>
    %73 = vector.shape_cast %72 : vector<8xf32> to vector<8x1xf32>
    %74 = vector.broadcast %73 : vector<8x1xf32> to vector<8x8xf32>
    %75 = arith.subf %71, %74 : vector<8x8xf32>
    %76 = math.exp %75 : vector<8x8xf32>
    %cst_28 = arith.constant dense<0.000000e+00> : vector<8xf32>
    %77 = vector.multi_reduction <add>, %76, %cst_28 [1] : vector<8x8xf32> to vector<8xf32>
    %78 = vector.shape_cast %77 : vector<8xf32> to vector<8x1xf32>
    %79 = vector.broadcast %78 : vector<8x1xf32> to vector<8x8xf32>
    %80 = arith.divf %76, %79 : vector<8x8xf32>
    %cst_29 = arith.constant dense<0.000000e+00> : vector<8x8xf32>
    %81 = tpu.matmul %80, %68, %cst_29 {dimension_numbers = #tpu.dot_dimension_numbers<[1], [0], [0], [1], [0, 0, 1, 1], [], []>} : vector<8x8xf32>, vector<8x8xf32>, vector<8x8xf32> -> vector<8x8xf32>
    %82 = vector.extract_strided_slice %31 {offsets = [0, 24], sizes = [8, 8], strides = [1, 1]} : vector<8x32xf32> to vector<8x8xf32>
    %83 = vector.extract_strided_slice %32 {offsets = [0, 24], sizes = [8, 8], strides = [1, 1]} : vector<8x32xf32> to vector<8x8xf32>
    %84 = vector.extract_strided_slice %33 {offsets = [0, 24], sizes = [8, 8], strides = [1, 1]} : vector<8x32xf32> to vector<8x8xf32>
    %cst_30 = arith.constant dense<0.000000e+00> : vector<8x8xf32>
    %85 = tpu.matmul %82, %83, %cst_30 {dimension_numbers = #tpu.dot_dimension_numbers<[1], [1], [0], [0], [0, 0, 1, 0], [], []>} : vector<8x8xf32>, vector<8x8xf32>, vector<8x8xf32> -> vector<8x8xf32>
    %cst_31 = arith.constant 0.353553385 : f32
    %86 = vector.broadcast %cst_31 : f32 to vector<8x8xf32>
    %87 = arith.mulf %85, %86 : vector<8x8xf32>
    %cst_32 = arith.constant dense<0xFF800000> : vector<8xf32>
    %88 = vector.multi_reduction <maximumf>, %87, %cst_32 [1] : vector<8x8xf32> to vector<8xf32>
    %89 = vector.shape_cast %88 : vector<8xf32> to vector<8x1xf32>
    %90 = vector.broadcast %89 : vector<8x1xf32> to vector<8x8xf32>
    %91 = arith.subf %87, %90 : vector<8x8xf32>
    %92 = math.exp %91 : vector<8x8xf32>
    %cst_33 = arith.constant dense<0.000000e+00> : vector<8xf32>
    %93 = vector.multi_reduction <add>, %92, %cst_33 [1] : vector<8x8xf32> to vector<8xf32>
    %94 = vector.shape_cast %93 : vector<8xf32> to vector<8x1xf32>
    %95 = vector.broadcast %94 : vector<8x1xf32> to vector<8x8xf32>
    %96 = arith.divf %92, %95 : vector<8x8xf32>
    %cst_34 = arith.constant dense<0.000000e+00> : vector<8x8xf32>
    %97 = tpu.matmul %96, %84, %cst_34 {dimension_numbers = #tpu.dot_dimension_numbers<[1], [0], [0], [1], [0, 0, 1, 1], [], []>} : vector<8x8xf32>, vector<8x8xf32>, vector<8x8xf32> -> vector<8x8xf32>
    %98 = vector.shape_cast %48 : vector<8x8xf32> to vector<1x8x8xf32>
    %99 = vector.shape_cast %64 : vector<8x8xf32> to vector<1x8x8xf32>
    %100 = vector.shape_cast %80 : vector<8x8xf32> to vector<1x8x8xf32>
    %101 = vector.shape_cast %96 : vector<8x8xf32> to vector<1x8x8xf32>
    %102 = tpu.concatenate %98, %99, %100, %101 in 0 : vector<1x8x8xf32>, vector<1x8x8xf32>, vector<1x8x8xf32>, vector<1x8x8xf32> -> vector<4x8x8xf32>
    %c0_35 = arith.constant 0 : index
    %c0_36 = arith.constant 0 : index
    %c0_37 = arith.constant 0 : index
    %c0_38 = arith.constant 0 : index
    %103 = vector.load %arg9[%c0_35, %c0_36, %c0_37, %c0_38] : memref<1x4x8x8xf32, #tpu.memory_space<vmem>>, vector<1x4x8x8xf32>
    %104 = vector.shape_cast %103 : vector<1x4x8x8xf32> to vector<4x8x8xf32>
    %105 = vector.shape_cast %102 : vector<4x8x8xf32> to vector<1x4x8x8xf32>
    tpu.vector_store %arg9[%c0_35, %c0_36, %c0_37, %c0_38], %105 {strides = array<i32>} : memref<1x4x8x8xf32, #tpu.memory_space<vmem>>, vector<1x4x8x8xf32>,
    %106 = tpu.concatenate %49, %65, %81, %97 in 1 : vector<8x8xf32>, vector<8x8xf32>, vector<8x8xf32>, vector<8x8xf32> -> vector<8x32xf32>
    %c0_39 = arith.constant 0 : index
    %c0_40 = arith.constant 0 : index
    %107 = vector.load %arg6[%c0_39, %c0_40] : memref<32x32xf32, #tpu.memory_space<vmem>>, vector<32x32xf32>
    %cst_41 = arith.constant dense<0.000000e+00> : vector<8x32xf32>
    %108 = tpu.matmul %106, %107, %cst_41 {dimension_numbers = #tpu.dot_dimension_numbers<[1], [0], [0], [1], [0, 0, 1, 1], [], []>} : vector<8x32xf32>, vector<32x32xf32>, vector<8x32xf32> -> vector<8x32xf32>
    %c0_42 = arith.constant 0 : index
    %c0_43 = arith.constant 0 : index
    %109 = vector.load %arg7[%c0_42, %c0_43] : memref<1x32xf32, #tpu.memory_space<vmem>>, vector<1x32xf32>
    %110 = vector.broadcast %109 : vector<1x32xf32> to vector<8x32xf32>
    %111 = arith.addf %108, %110 : vector<8x32xf32>
    %112 = arith.addf %111, %1 : vector<8x32xf32>
    %c0_44 = arith.constant 0 : index
    %c0_45 = arith.constant 0 : index
    %c0_46 = arith.constant 0 : index
    %113 = vector.load %arg8[%c0_44, %c0_45, %c0_46] : memref<1x8x32xf32, #tpu.memory_space<vmem>>, vector<1x8x32xf32>
    %114 = vector.shape_cast %113 : vector<1x8x32xf32> to vector<8x32xf32>
    %115 = vector.shape_cast %112 : vector<8x32xf32> to vector<1x8x32xf32>
    tpu.vector_store %arg8[%c0_44, %c0_45, %c0_46], %115 {strides = array<i32>} : memref<1x8x32xf32, #tpu.memory_space<vmem>>, vector<1x8x32xf32>,
    return
  }
  func.func @transform_0(%arg0: i32) -> (i32, i32, i32) {
    %c0_i32 = arith.constant 0 : i32
    %c0_i32_0 = arith.constant 0 : i32
    %c0_i32_1 = arith.constant 0 : i32
    return %arg0, %c0_i32, %c0_i32_0 : i32, i32, i32
  }
  func.func @transform_1(%arg0: i32) -> (i32, i32) {
    %c0_i32 = arith.constant 0 : i32
    %c0_i32_0 = arith.constant 0 : i32
    %c0_i32_1 = arith.constant 0 : i32
    return %c0_i32, %c0_i32_0 : i32, i32
  }
  func.func @transform_2(%arg0: i32) -> (i32, i32) {
    %c0_i32 = arith.constant 0 : i32
    %c0_i32_0 = arith.constant 0 : i32
    %c0_i32_1 = arith.constant 0 : i32
    return %c0_i32, %c0_i32_0 : i32, i32
  }
  func.func @transform_3(%arg0: i32) -> (i32, i32) {
    %c0_i32 = arith.constant 0 : i32
    %c0_i32_0 = arith.constant 0 : i32
    %c0_i32_1 = arith.constant 0 : i32
    return %c0_i32, %c0_i32_0 : i32, i32
  }
  func.func @transform_4(%arg0: i32) -> (i32, i32) {
    %c0_i32 = arith.constant 0 : i32
    %c0_i32_0 = arith.constant 0 : i32
    %c0_i32_1 = arith.constant 0 : i32
    return %c0_i32, %c0_i32_0 : i32, i32
  }
  func.func @transform_5(%arg0: i32) -> (i32, i32) {
    %c0_i32 = arith.constant 0 : i32
    %c0_i32_0 = arith.constant 0 : i32
    %c0_i32_1 = arith.constant 0 : i32
    return %c0_i32, %c0_i32_0 : i32, i32
  }
  func.func @transform_6(%arg0: i32) -> (i32, i32) {
    %c0_i32 = arith.constant 0 : i32
    %c0_i32_0 = arith.constant 0 : i32
    %c0_i32_1 = arith.constant 0 : i32
    return %c0_i32, %c0_i32_0 : i32, i32
  }
  func.func @transform_7(%arg0: i32) -> (i32, i32, i32) {
    %c0_i32 = arith.constant 0 : i32
    %c0_i32_0 = arith.constant 0 : i32
    %c0_i32_1 = arith.constant 0 : i32
    return %arg0, %c0_i32, %c0_i32_0 : i32, i32, i32
  }
  func.func @transform_8(%arg0: i32) -> (i32, i32, i32, i32) {
    %c0_i32 = arith.constant 0 : i32
    %c0_i32_0 = arith.constant 0 : i32
    %c0_i32_1 = arith.constant 0 : i32
    %c0_i32_2 = arith.constant 0 : i32
    return %arg0, %c0_i32, %c0_i32_0, %c0_i32_1 : i32, i32, i32, i32
  }
}

</mosaic_0001>

<llo_original>
// kernel: tpu_custom_call.1
$region0: #{tpu_custom_call.1}
  #allocation0 [shape = 'u32[]', space=smem, size = 0x4, offset = 0x4, fixed_abs, tag = 'smem constant byte address 0x4 - core index']
  #allocation1 [shape = 'u32[144,128]{1,0:T(1,128)}', space=vmem, size = 0x12000, scoped, tag = 'internal scratch']
  %s0 = inlined_call_operand.hbm [shape: f32[2,8,32], index: 0, kind: input, shape index: {}]
  %s1 = inlined_call_operand.vmem [shape: f32[1,32], index: 1, kind: input, shape index: {}]
  %s2 = inlined_call_operand.vmem [shape: f32[1,32], index: 2, kind: input, shape index: {}]
  %s3 = inlined_call_operand.hbm [shape: f32[32,96], index: 3, kind: input, shape index: {}]
  %s4 = inlined_call_operand.vmem [shape: f32[1,96], index: 4, kind: input, shape index: {}]
  %s5 = inlined_call_operand.hbm [shape: f32[32,32], index: 5, kind: input, shape index: {}]
  %s6 = inlined_call_operand.vmem [shape: f32[1,32], index: 6, kind: input, shape index: {}]
  %s7 = inlined_call_operand.hbm [shape: f32[2,8,32], index: 7, kind: output, shape index: {0}]
  %s8 = inlined_call_operand.hbm [shape: f32[2,4,8,8], index: 8, kind: output, shape index: {1}]
  %9 = xla_tuple %s7, %s8
  %s10 = sld [smem:[#allocation0]]
  $region81: #{tpu_custom_call.1} parent=0
    _
  %s12 = ssub.s32 1, %s10
  %s13 = scalar_select 0, %s12, %s10
  $region1: #{tpu_custom_call.1} parent=0
    #allocation2 [shape = 'u8[8192]{0}', space=vmem, size = 0x2000, scoped, tag = 'input window, operand 0']
    #allocation3 [shape = 's32[2]{0}', space=sflag, size = 0x8, scoped, tag = 'scoped memory for tpu_custom_call.1']
    #allocation4 [shape = 's32[2]{0}', space=sflag, size = 0x8, scoped, tag = 'scoped memory for tpu_custom_call.1']
    #allocation5 [shape = 'u8[16384]{0}', space=vmem, size = 0x4000, scoped, tag = 'input window, operand 3, single buffered']
    #allocation6 [shape = 's32[1]{0}', space=sflag, size = 0x4, scoped, tag = 'scoped memory for tpu_custom_call.1']
    #allocation7 [shape = 'u8[16384]{0}', space=vmem, size = 0x4000, scoped, tag = 'input window, operand 5, single buffered']
    #allocation8 [shape = 'u8[8192]{0}', space=vmem, size = 0x2000, scoped, tag = 'output window, operand 0']
    #allocation9 [shape = 'u8[32768]{0}', space=vmem, size = 0x8000, scoped, tag = 'output window, operand 1']
    #allocation10 [shape = 's32[2]{0}', space=sflag, size = 0x8, scoped, tag = 'scoped memory for tpu_custom_call.1']
    %14 = vsyncpa [#allocation3], 0
    %s15 = scalar_lea.sflag [#allocation3], 1
    %16 = vsyncpa %s15, 0
    %17 = vsyncpa [#allocation6], 0
    %18 = vsyncpa [#allocation4], 0
    %s19 = scalar_lea.sflag [#allocation4], 1
    %20 = vsyncpa %s19, 0
    %21 = vsyncpa [#allocation10], 0
    %s22 = scalar_lea.sflag [#allocation10], 1
    %23 = vsyncpa %s22, 0
    loop: start=0, step=1, limit=4
    $region2: #{tpu_custom_call.1} parent=1 // loop_pre_header
      _
    $region3: #{tpu_custom_call.1} parent=1 // loop_header
      %s25 = sphi 0, %s29
      %p26 = scmp.ge.s32.totalorder %s25, 4
      %s35 = sphi 0, %s37
      %s38 = sphi 0, %s35
      %s39 = sphi 0, %s38
      %s55 = sphi 0, %s39
      %s59 = sphi 0, %s59
      %s61 = sphi 0, %s59
      %s62 = sphi 0, %s61
      %s76 = sphi 0, %s62
      %s80 = sphi 0, %s80
      %s82 = sphi 0, %s80
      %s83 = sphi 0, %s82
      %s97 = sphi 0, %s83
      %s101 = sphi 0, %s101
      %s103 = sphi 0, %s101
      %s104 = sphi 0, %s103
      %s118 = sphi 0, %s104
      %s122 = sphi 0, %s122
      %s124 = sphi 0, %s122
      %s125 = sphi 0, %s124
      %s139 = sphi 0, %s125
      %s143 = sphi 0, %s143
      %s145 = sphi 0, %s143
      %s146 = sphi 0, %s145
      %s160 = sphi 0, %s146
      %s164 = sphi 0, %s164
      %s166 = sphi 0, %s164
      %s167 = sphi 0, %s166
      %s181 = sphi 0, %s167
      %s187 = sphi 0, %s189
      %s190 = sphi 0, %s187
      %s191 = sphi 0, %s190
      %s207 = sphi 0, %s191
      %s213 = sphi 0, %s215
      %s216 = sphi 0, %s213
      %s217 = sphi 0, %s216
      %s233 = sphi 0, %s217
    $region4: #{tpu_custom_call.1} parent=1 // loop_header_branch
      %28 = sbr.rel (%p26) target = $region8
    $region5: #{tpu_custom_call.1} parent=1 // loop_body
      %s30 = ssub.s32 %s25, 1
      %s31 = ssub.s32 %s25, 2
      %s32 = sadd.s32 %s25, 1
      %s33 = ssub.s32 %s25, %s32
      %p34 = scmp.eq.s32.totalorder %s33, 0
      %s36 = sadd.s32 %s35, 1
      %s37 = scalar_select %p34, %s35, %s36
      %p40 = pneg %p34
      %p41 = scmp.eq.s32.totalorder %s25, 1
      %p42 = por %p40, %p41
      %p43 = scmp.ne.s32.totalorder %s35, %s38
      %p44 = scmp.eq.s32.totalorder %s25, 0
      %p45 = por %p43, %p44
      %p46 = scmp.ne.s32.totalorder %s35, %s38
      %p47 = scmp.eq.s32.totalorder %s30, 1
      %p48 = por %p46, %p47
      %p49 = scmp.ne.s32.totalorder %s38, %s39
      %p50 = scmp.eq.s32.totalorder %s30, 0
      %p51 = por %p49, %p50
      %p52 = scmp.ne.s32.totalorder %s38, %s39
      %p53 = scmp.eq.s32.totalorder %s31, 1
      %p54 = por %p52, %p53
      %p56 = scmp.ne.s32.totalorder %s39, %s55
      %p57 = scmp.eq.s32.totalorder %s31, 0
      %p58 = por %p56, %p57
      %s60 = sadd.s32 %s59, 1
      %p63 = scmp.eq.s32.totalorder %s25, 1
      %p64 = scmp.ne.s32.totalorder %s59, %s61
      %p65 = scmp.eq.s32.totalorder %s25, 0
      %p66 = por %p64, %p65
      %p67 = scmp.ne.s32.totalorder %s59, %s61
      %p68 = scmp.eq.s32.totalorder %s30, 1
      %p69 = por %p67, %p68
      %p70 = scmp.ne.s32.totalorder %s61, %s62
      %p71 = scmp.eq.s32.totalorder %s30, 0
      %p72 = por %p70, %p71
      %p73 = scmp.ne.s32.totalorder %s61, %s62
      %p74 = scmp.eq.s32.totalorder %s31, 1
      %p75 = por %p73, %p74
      %p77 = scmp.ne.s32.totalorder %s62, %s76
      %p78 = scmp.eq.s32.totalorder %s31, 0
      %p79 = por %p77, %p78
      %s81 = sadd.s32 %s80, 1
      %p84 = scmp.eq.s32.totalorder %s25, 1
      %p85 = scmp.ne.s32.totalorder %s80, %s82
      %p86 = scmp.eq.s32.totalorder %s25, 0
      %p87 = por %p85, %p86
      %p88 = scmp.ne.s32.totalorder %s80, %s82
      %p89 = scmp.eq.s32.totalorder %s30, 1
      %p90 = por %p88, %p89
      %p91 = scmp.ne.s32.totalorder %s82, %s83
      %p92 = scmp.eq.s32.totalorder %s30, 0
      %p93 = por %p91, %p92
      %p94 = scmp.ne.s32.totalorder %s82, %s83
      %p95 = scmp.eq.s32.totalorder %s31, 1
      %p96 = por %p94, %p95
      %p98 = scmp.ne.s32.totalorder %s83, %s97
      %p99 = scmp.eq.s32.totalorder %s31, 0
      %p100 = por %p98, %p99
      %s102 = sadd.s32 %s101, 1
      %p105 = scmp.eq.s32.totalorder %s25, 1
      %p106 = scmp.ne.s32.totalorder %s101, %s103
      %p107 = scmp.eq.s32.totalorder %s25, 0
      %p108 = por %p106, %p107
      %p109 = scmp.ne.s32.totalorder %s101, %s103
      %p110 = scmp.eq.s32.totalorder %s30, 1
      %p111 = por %p109, %p110
      %p112 = scmp.ne.s32.totalorder %s103, %s104
      %p113 = scmp.eq.s32.totalorder %s30, 0
      %p114 = por %p112, %p113
      %p115 = scmp.ne.s32.totalorder %s103, %s104
      %p116 = scmp.eq.s32.totalorder %s31, 1
      %p117 = por %p115, %p116
      %p119 = scmp.ne.s32.totalorder %s104, %s118
      %p120 = scmp.eq.s32.totalorder %s31, 0
      %p121 = por %p119, %p120
      %s123 = sadd.s32 %s122, 1
      %p126 = scmp.eq.s32.totalorder %s25, 1
      %p127 = scmp.ne.s32.totalorder %s122, %s124
      %p128 = scmp.eq.s32.totalorder %s25, 0
      %p129 = por %p127, %p128
      %p130 = scmp.ne.s32.totalorder %s122, %s124
      %p131 = scmp.eq.s32.totalorder %s30, 1
      %p132 = por %p130, %p131
      %p133 = scmp.ne.s32.totalorder %s124, %s125
      %p134 = scmp.eq.s32.totalorder %s30, 0
      %p135 = por %p133, %p134
      %p136 = scmp.ne.s32.totalorder %s124, %s125
      %p137 = scmp.eq.s32.totalorder %s31, 1
      %p138 = por %p136, %p137
      %p140 = scmp.ne.s32.totalorder %s125, %s139
      %p141 = scmp.eq.s32.totalorder %s31, 0
      %p142 = por %p140, %p141
      %s144 = sadd.s32 %s143, 1
      %p147 = scmp.eq.s32.totalorder %s25, 1
      %p148 = scmp.ne.s32.totalorder %s143, %s145
      %p149 = scmp.eq.s32.totalorder %s25, 0
      %p150 = por %p148, %p149
      %p151 = scmp.ne.s32.totalorder %s143, %s145
      %p152 = scmp.eq.s32.totalorder %s30, 1
      %p153 = por %p151, %p152
      %p154 = scmp.ne.s32.totalorder %s145, %s146
      %p155 = scmp.eq.s32.totalorder %s30, 0
      %p156 = por %p154, %p155
      %p157 = scmp.ne.s32.totalorder %s145, %s146
      %p158 = scmp.eq.s32.totalorder %s31, 1
      %p159 = por %p157, %p158
      %p161 = scmp.ne.s32.totalorder %s146, %s160
      %p162 = scmp.eq.s32.totalorder %s31, 0
      %p163 = por %p161, %p162
      %s165 = sadd.s32 %s164, 1
      %p168 = scmp.eq.s32.totalorder %s25, 1
      %p169 = scmp.ne.s32.totalorder %s164, %s166
      %p170 = scmp.eq.s32.totalorder %s25, 0
      %p171 = por %p169, %p170
      %p172 = scmp.ne.s32.totalorder %s164, %s166
      %p173 = scmp.eq.s32.totalorder %s30, 1
      %p174 = por %p172, %p173
      %p175 = scmp.ne.s32.totalorder %s166, %s167
      %p176 = scmp.eq.s32.totalorder %s30, 0
      %p177 = por %p175, %p176
      %p178 = scmp.ne.s32.totalorder %s166, %s167
      %p179 = scmp.eq.s32.totalorder %s31, 1
      %p180 = por %p178, %p179
      %p182 = scmp.ne.s32.totalorder %s167, %s181
      %p183 = scmp.eq.s32.totalorder %s31, 0
      %p184 = por %p182, %p183
      %s185 = ssub.s32 %s25, %s32
      %p186 = scmp.eq.s32.totalorder %s185, 0
      %s188 = sadd.s32 %s187, 1
      %s189 = scalar_select %p186, %s187, %s188
      %p192 = pneg %p186
      %p193 = scmp.eq.s32.totalorder %s25, 1
      %p194 = por %p192, %p193
      %p195 = scmp.ne.s32.totalorder %s187, %s190
      %p196 = scmp.eq.s32.totalorder %s25, 0
      %p197 = por %p195, %p196
      %p198 = scmp.ne.s32.totalorder %s187, %s190
      %p199 = scmp.eq.s32.totalorder %s30, 1
      %p200 = por %p198, %p199
      %p201 = scmp.ne.s32.totalorder %s190, %s191
      %p202 = scmp.eq.s32.totalorder %s30, 0
      %p203 = por %p201, %p202
      %p204 = scmp.ne.s32.totalorder %s190, %s191
      %p205 = scmp.eq.s32.totalorder %s31, 1
      %p206 = por %p204, %p205
      %p208 = scmp.ne.s32.totalorder %s191, %s207
      %p209 = scmp.eq.s32.totalorder %s31, 0
      %p210 = por %p208, %p209
      %s211 = ssub.s32 %s25, %s32
      %p212 = scmp.eq.s32.totalorder %s211, 0
      %s214 = sadd.s32 %s213, 1
      %s215 = scalar_select %p212, %s213, %s214
      %p218 = pneg %p212
      %p219 = scmp.eq.s32.totalorder %s25, 1
      %p220 = por %p218, %p219
      %p221 = scmp.ne.s32.totalorder %s213, %s216
      %p222 = scmp.eq.s32.totalorder %s25, 0
      %p223 = por %p221, %p222
      %p224 = scmp.ne.s32.totalorder %s213, %s216
      %p225 = scmp.eq.s32.totalorder %s30, 1
      %p226 = por %p224, %p225
      %p227 = scmp.ne.s32.totalorder %s216, %s217
      %p228 = scmp.eq.s32.totalorder %s30, 0
      %p229 = por %p227, %p228
      %p230 = scmp.ne.s32.totalorder %s216, %s217
      %p231 = scmp.eq.s32.totalorder %s31, 1
      %p232 = por %p230, %p231
      %p234 = scmp.ne.s32.totalorder %s217, %s233
      %p235 = scmp.eq.s32.totalorder %s31, 0
      %p236 = por %p234, %p235
      %p237 = scmp.le.s32.totalorder 1, %s25
      %p238 = scmp.lt.s32.totalorder %s25, 3
      %p239 = pnand %p237, %p238
      %p240 = pneg %p239
      // Predicated region
      $region9: #{tpu_custom_call.1} parent=5 // pred_check
        _
      $region10: #{tpu_custom_call.1} parent=5 // pred_check_branch
        %242 = sbr.rel (%p239) target = $region12
      $region11: #{tpu_custom_call.1} parent=5 // pred_region
        %s243 = ssub.s32 %s25, 1
        // Predicated region
        $region13: #{tpu_custom_call.1} parent=11 // pred_check
          %p244 = pneg %p72
        $region14: #{tpu_custom_call.1} parent=11 // pred_check_branch
          %246 = sbr.rel (%p244) target = $region16
        $region15: #{tpu_custom_call.1} parent=11 // pred_region
          _
        $region16: #{tpu_custom_call.1} parent=11 // pred_fallthru
          _
        // Predicated region
        $region17: #{tpu_custom_call.1} parent=11 // pred_check
          %p247 = pneg %p93
        $region18: #{tpu_custom_call.1} parent=11 // pred_check_branch
          %249 = sbr.rel (%p247) target = $region20
        $region19: #{tpu_custom_call.1} parent=11 // pred_region
          _
        $region20: #{tpu_custom_call.1} parent=11 // pred_fallthru
          _
        // Predicated region
        $region21: #{tpu_custom_call.1} parent=11 // pred_check
          %p250 = pneg %p114
        $region22: #{tpu_custom_call.1} parent=11 // pred_check_branch
          %252 = sbr.rel (%p250) target = $region24
        $region23: #{tpu_custom_call.1} parent=11 // pred_region
          %s254 = ssub.s32 512, 512
          %255 = vsyncadd [#allocation6], %s254
          %s256 = sshll.u32 [#allocation5], 4
          %s257 = int_to_ptr.vmem [resolvable:$true] %s256
          %262 = dma.hbm_to_vmem [thread:$0]  %s3, 512, %s257, [#allocation6], 128, 128, 8
        $region24: #{tpu_custom_call.1} parent=11 // pred_fallthru
          _
        // Predicated region
        $region25: #{tpu_custom_call.1} parent=11 // pred_check
          %p263 = pneg %p135
        $region26: #{tpu_custom_call.1} parent=11 // pred_check_branch
          %265 = sbr.rel (%p263) target = $region28
        $region27: #{tpu_custom_call.1} parent=11 // pred_region
          _
        $region28: #{tpu_custom_call.1} parent=11 // pred_fallthru
          _
        // Predicated region
        $region29: #{tpu_custom_call.1} parent=11 // pred_check
          %p266 = pneg %p156
        $region30: #{tpu_custom_call.1} parent=11 // pred_check_branch
          %268 = sbr.rel (%p266) target = $region32
        $region31: #{tpu_custom_call.1} parent=11 // pred_region
          %s270 = ssub.s32 512, 512
          %271 = vsyncadd [#allocation6], %s270
          %s272 = sshll.u32 [#allocation7], 4
          %s273 = int_to_ptr.vmem [resolvable:$true] %s272
          %278 = dma.hbm_to_vmem [thread:$0]  %s5, 512, %s273, [#allocation6], 128, 128, 8
        $region32: #{tpu_custom_call.1} parent=11 // pred_fallthru
          _
        // Predicated region
        $region33: #{tpu_custom_call.1} parent=11 // pred_check
          %p279 = pneg %p177
        $region34: #{tpu_custom_call.1} parent=11 // pred_check_branch
          %281 = sbr.rel (%p279) target = $region36
        $region35: #{tpu_custom_call.1} parent=11 // pred_region
          _
        $region36: #{tpu_custom_call.1} parent=11 // pred_fallthru
          _
      $region12: #{tpu_custom_call.1} parent=5 // pred_fallthru
        _
      %p282 = scmp.lt.s32.totalorder %s25, 2
      // Predicated region
      $region37: #{tpu_custom_call.1} parent=5 // pred_check
        %p283 = pneg %p282
      $region38: #{tpu_custom_call.1} parent=5 // pred_check_branch
        %285 = sbr.rel (%p283) target = $region40
      $region39: #{tpu_custom_call.1} parent=5 // pred_region
        // Predicated region
        $region41: #{tpu_custom_call.1} parent=39 // pred_check
          %p286 = pneg %p45
        $region42: #{tpu_custom_call.1} parent=39 // pred_check_branch
          %288 = sbr.rel (%p286) target = $region44
        $region43: #{tpu_custom_call.1} parent=39 // pred_region
          %s289 = sand.u32 %s35, 1
          %s290 = scalar_lea.sflag [#allocation3], %s289
          %s291 = sand.u32 %s35, 1
          %s292 = smul.addr %s291, 8
          %s293 = scalar_lea.vmem [#allocation2], %s292
          %s295 = ssub.s32 128, 128
          %296 = vsyncadd %s290, %s295
          %s297 = smul.addr %s25, 128
          %s298 = scalar_lea.hbm %s0, %s297
          %s300 = sshll.u32 %s293, 4
          %s301 = int_to_ptr.vmem [resolvable:$true] %s300
          %303 = dma.hbm_to_vmem [thread:$0]  %s298, 128, %s301, %s290
        $region44: #{tpu_custom_call.1} parent=39 // pred_fallthru
          _
      $region40: #{tpu_custom_call.1} parent=5 // pred_fallthru
        _
      %p304 = scmp.le.s32.totalorder 1, %s25
      %p305 = scmp.lt.s32.totalorder %s25, 3
      %p306 = pnand %p304, %p305
      %p307 = pneg %p306
      // Predicated region
      $region45: #{tpu_custom_call.1} parent=5 // pred_check
        _
      $region46: #{tpu_custom_call.1} parent=5 // pred_check_branch
        %309 = sbr.rel (%p306) target = $region48
      $region47: #{tpu_custom_call.1} parent=5 // pred_region
        %s310 = ssub.s32 %s25, 1
        %s311 = sand.u32 %s38, 1
        %s312 = scalar_lea.sflag [#allocation3], %s311
        %s313 = sand.u32 %s38, 1
        %s314 = smul.addr %s313, 8
        %s315 = scalar_lea.vmem [#allocation2], %s314
        // Predicated region
        $region49: #{tpu_custom_call.1} parent=47 // pred_check
          %p316 = pneg %p51
        $region50: #{tpu_custom_call.1} parent=47 // pred_check_branch
          %318 = sbr.rel (%p316) target = $region52
        $region51: #{tpu_custom_call.1} parent=47 // pred_region
          %319 = dma.done %s312, 128
        $region52: #{tpu_custom_call.1} parent=47 // pred_fallthru
          _
        // Predicated region
        $region53: #{tpu_custom_call.1} parent=47 // pred_check
          %p320 = pneg %p114
        $region54: #{tpu_custom_call.1} parent=47 // pred_check_branch
          %322 = sbr.rel (%p320) target = $region56
        $region55: #{tpu_custom_call.1} parent=47 // pred_region
          %323 = dma.done [#allocation6], 512
        $region56: #{tpu_custom_call.1} parent=47 // pred_fallthru
          _
        // Predicated region
        $region57: #{tpu_custom_call.1} parent=47 // pred_check
          %p324 = pneg %p156
        $region58: #{tpu_custom_call.1} parent=47 // pred_check_branch
          %326 = sbr.rel (%p324) target = $region60
        $region59: #{tpu_custom_call.1} parent=47 // pred_region
          %327 = dma.done [#allocation6], 512
        $region60: #{tpu_custom_call.1} parent=47 // pred_fallthru
          _
        %s328 = sand.u32 %s38, 1
        %s329 = scalar_lea.sflag [#allocation3], %s328
        %s330 = sand.u32 %s38, 1
        %s331 = smul.addr %s330, 8
        %s332 = scalar_lea.vmem [#allocation2], %s331
        %p333 = pneg %p51
        %p334 = pneg %p48
        %p335 = pneg %p72
        %p336 = pneg %p69
        %p337 = pneg %p93
        %p338 = pneg %p90
        %p339 = pneg %p114
        %p340 = pneg %p111
        %p341 = pneg %p135
        %p342 = pneg %p132
        %p343 = pneg %p156
        %p344 = pneg %p153
        %p345 = pneg %p177
        %p346 = pneg %p174
        %p347 = pneg %p203
        %p348 = pneg %p200
        %s349 = sand.u32 %s190, 1
        %s350 = scalar_lea.sflag [#allocation4], %s349
        %s351 = sand.u32 %s190, 1
        %s352 = smul.addr %s351, 8
        %s353 = scalar_lea.vmem [#allocation8], %s352
        %p354 = pneg %p229
        %p355 = pneg %p226
        %s356 = sand.u32 %s216, 1
        %s357 = scalar_lea.sflag [#allocation10], %s356
        %s358 = sand.u32 %s216, 1
        %s359 = smul.addr %s358, 32
        %s360 = scalar_lea.vmem [#allocation9], %s359
        %v361 = vld [vmem:[%s315] sm:$0xff]
        %v362 = vld [vmem:[%s1] sm:$0x1]
        %v363 = vld [vmem:[%s2] sm:$0x1]
        %vm364 = vcmask 261120
        %v365 = vsel %vm364, %v361, 0.0
        %366 = vadd.xlane.f32.xlu0 %v365
        %v367 = vpop.xlane.xlu0 %366
        %v368 = vrcp.pop 32.0
        %v369 = vmul.f32 %v367, %v368
        %v370 = vsub.f32 %v361, %v369
        %v371 = vmul.f32 %v370, %v370
        %v372 = vsel %vm364, %v371, 0.0
        %373 = vadd.xlane.f32.xlu0 %v372
        %v374 = vpop.xlane.xlu0 %373
        %v375 = vmul.f32 %v374, %v368
        %v376 = vadd.f32 %v375, 1e-05
        %v377 = vrsqrt.pop %v376
        %v378 = vmul.f32 %v370, %v377
        %v380 = vlaneseq
        %v381 = vshrl.u32 %v380, 7
        %v382 = vsub.s32 0, %v381
        %v383 = vrot.slane %v362, %v382
        %v385 = vmul.f32 %v378, %v383
        %v387 = vlaneseq
        %v388 = vshrl.u32 %v387, 7
        %v389 = vsub.s32 0, %v388
        %v390 = vrot.slane %v363, %v389
        %v392 = vadd.f32 %v385, %v390
        %v393 = vld [vmem:[#allocation5] sm:$0xff]
        %v394 = vld [vmem:[#allocation5 + $0x8] sm:$0xff]
        %v395 = vld [vmem:[#allocation5 + $0x10] sm:$0xff]
        %v396 = vld [vmem:[#allocation5 + $0x18] sm:$0xff]
        %v397 = vld [vmem:[%s4] sm:$0x1]
        %v399 = vlaneseq
        %v400 = vshrl.u32 %v399, 7
        %v401 = vsub.s32 0, %v400
        %v402 = vrot.slane %v397, %v401
        %v405 = vsel %vm364, %v392, 0
        %407 = vmatprep.subr.mxu0 0.0
        %408 = vmatpush1.msra.mxu0 %v393
        %409 = vmatprep.subr.mxu0 0.0
        %410 = vmatpush1.msra.mxu0 %v394
        %411 = vmatprep.subr.mxu0 0.0
        %412 = vmatpush1.msra.mxu0 %v395
        %413 = vmatprep.subr.mxu0 0.0
        %414 = vmatpush1.msra.mxu0 %v396
        %415 = vmatprep.subr.mxu0 0.0
        %416 = vmatpush1.msra.mxu0 0.0
        %417 = vmatprep.subr.mxu0 0.0
        %418 = vmatpush1.msra.mxu0 0.0
        %419 = vmatprep.subr.mxu0 0.0
        %420 = vmatpush1.msra.mxu0 0.0
        %421 = vmatprep.subr.mxu0 0.0
        %422 = vmatpush1.msra.mxu0 0.0
        %423 = vmatprep.subr.mxu0 0.0
        %424 = vmatpush1.msra.mxu0 0.0
        %425 = vmatprep.subr.mxu0 0.0
        %426 = vmatpush1.msra.mxu0 0.0
        %427 = vmatprep.subr.mxu0 0.0
        %428 = vmatpush1.msra.mxu0 0.0
        %429 = vmatprep.subr.mxu0 0.0
        %430 = vmatpush1.msra.mxu0 0.0
        %431 = vmatprep.subr.mxu0 0.0
        %432 = vmatpush1.msra.mxu0 0.0
        %433 = vmatprep.subr.mxu0 0.0
        %434 = vmatpush1.msra.mxu0 0.0
        %435 = vmatprep.subr.mxu0 0.0
        %436 = vmatpush1.msra.mxu0 0.0
        %437 = vmatprep.subr.mxu0 0.0
        %438 = vmatpush1.msra.mxu0 0.0
        %439 = vmatprep.subr.mxu0 0.0
        %440 = vmatpush1.msra.mxu0 0.0
        %441 = vmatprep.subr.mxu0 0.0
        %442 = vmatpush1.msra.mxu0 0.0
        %443 = vmatprep.subr.mxu0 0.0
        %444 = vmatpush1.msra.mxu0 0.0
        %445 = vmatprep.subr.mxu0 0.0
        %446 = vmatpush1.msra.mxu0 0.0
        %447 = vmatprep.subr.mxu0 0.0
        %448 = vmatpush1.msra.mxu0 0.0
        %449 = vmatprep.subr.mxu0 0.0
        %450 = vmatpush1.msra.mxu0 0.0
        %451 = vmatprep.subr.mxu0 0.0
        %452 = vmatpush1.msra.mxu0 0.0
        %453 = vmatprep.subr.mxu0 0.0
        %454 = vmatpush1.msra.mxu0 0.0
        %455 = vmatprep.subr.mxu0 0.0
        %456 = vmatpush1.msra.mxu0 0.0
        %457 = vmatprep.subr.mxu0 0.0
        %458 = vmatpush1.msra.mxu0 0.0
        %459 = vmatprep.subr.mxu0 0.0
        %460 = vmatpush1.msra.mxu0 0.0
        %461 = vmatprep.subr.mxu0 0.0
        %462 = vmatpush1.msra.mxu0 0.0
        %463 = vmatprep.subr.mxu0 0.0
        %464 = vmatpush1.msra.mxu0 0.0
        %465 = vmatprep.subr.mxu0 0.0
        %466 = vmatpush1.msra.mxu0 0.0
        %467 = vmatprep.subr.mxu0 0.0
        %468 = vmatpush1.msra.mxu0 0.0
        %469 = vmatprep.subr.mxu0 0.0
        %470 = vmatpush1.msra.mxu0 0.0
        %471 = vmatprep.mubr.f32.mxu0 0.0
        %472 = vmatmul.mubr.f32.gmra.mrb[0].mxu0 %v405
        %v473 = vpop.f32.mrb[0].mxu0
        %v474 = vadd.f32 %v402, %v473
        %v475 = vpop.f32.mrb[0].mxu0
        %476 = vdwg.mxu0
        %478 = vrot.lane.b32.xlu0 %v474, 96
        %v479 = vpop.permute.xlu0 %478
        %vm480 = vcmask 64512
        %v481 = vsel %vm480, %v474, 0
        %v483 = vsel %vm480, %v479, 0
        %485 = vmatprep.subr.mxu0 0.0
        %486 = vmatpush1.xpose.msra.mxu0 %v483
        %487 = vmatprep.subr.mxu0 0.0
        %488 = vmatpush1.xpose.msra.mxu0 0.0
        %489 = vmatprep.subr.mxu0 0.0
        %490 = vmatpush1.xpose.msra.mxu0 0.0
        %491 = vmatprep.subr.mxu0 0.0
        %492 = vmatpush1.xpose.msra.mxu0 0.0
        %493 = vmatprep.subr.mxu0 0.0
        %494 = vmatpush1.xpose.msra.mxu0 0.0
        %495 = vmatprep.subr.mxu0 0.0
        %496 = vmatpush1.xpose.msra.mxu0 0.0
        %497 = vmatprep.subr.mxu0 0.0
        %498 = vmatpush1.xpose.msra.mxu0 0.0
        %499 = vmatprep.subr.mxu0 0.0
        %500 = vmatpush1.xpose.msra.mxu0 0.0
        %501 = vmatprep.subr.mxu0 0.0
        %502 = vmatpush1.xpose.msra.mxu0 0.0
        %503 = vmatprep.subr.mxu0 0.0
        %504 = vmatpush1.xpose.msra.mxu0 0.0
        %505 = vmatprep.subr.mxu0 0.0
        %506 = vmatpush1.xpose.msra.mxu0 0.0
        %507 = vmatprep.subr.mxu0 0.0
        %508 = vmatpush1.xpose.msra.mxu0 0.0
        %509 = vmatprep.subr.mxu0 0.0
        %510 = vmatpush1.xpose.msra.mxu0 0.0
        %511 = vmatprep.subr.mxu0 0.0
        %512 = vmatpush1.xpose.msra.mxu0 0.0
        %513 = vmatprep.subr.mxu0 0.0
        %514 = vmatpush1.xpose.msra.mxu0 0.0
        %515 = vmatprep.subr.mxu0 0.0
        %516 = vmatpush1.xpose.msra.mxu0 0.0
        %517 = vmatprep.subr.mxu0 0.0
        %518 = vmatpush1.xpose.msra.mxu0 0.0
        %519 = vmatprep.subr.mxu0 0.0
        %520 = vmatpush1.xpose.msra.mxu0 0.0
        %521 = vmatprep.subr.mxu0 0.0
        %522 = vmatpush1.xpose.msra.mxu0 0.0
        %523 = vmatprep.subr.mxu0 0.0
        %524 = vmatpush1.xpose.msra.mxu0 0.0
        %525 = vmatprep.subr.mxu0 0.0
        %526 = vmatpush1.xpose.msra.mxu0 0.0
        %527 = vmatprep.subr.mxu0 0.0
        %528 = vmatpush1.xpose.msra.mxu0 0.0
        %529 = vmatprep.subr.mxu0 0.0
        %530 = vmatpush1.xpose.msra.mxu0 0.0
        %531 = vmatprep.subr.mxu0 0.0
        %532 = vmatpush1.xpose.msra.mxu0 0.0
        %533 = vmatprep.subr.mxu0 0.0
        %534 = vmatpush1.xpose.msra.mxu0 0.0
        %535 = vmatprep.subr.mxu0 0.0
        %536 = vmatpush1.xpose.msra.mxu0 0.0
        %537 = vmatprep.subr.mxu0 0.0
        %538 = vmatpush1.xpose.msra.mxu0 0.0
        %539 = vmatprep.subr.mxu0 0.0
        %540 = vmatpush1.xpose.msra.mxu0 0.0
        %541 = vmatprep.subr.mxu0 0.0
        %542 = vmatpush1.xpose.msra.mxu0 0.0
        %543 = vmatprep.subr.mxu0 0.0
        %544 = vmatpush1.xpose.msra.mxu0 0.0
        %545 = vmatprep.subr.mxu0 0.0
        %546 = vmatpush1.xpose.msra.mxu0 0.0
        %547 = vmatprep.subr.mxu0 0.0
        %548 = vmatpush1.xpose.msra.mxu0 0.0
        %549 = vmatprep.mubr.f32.mxu0 0.0
        %550 = vmatmul.mubr.f32.gmra.mrb[0].mxu0 %v481
        %v551 = vpop.f32.mrb[0].mxu0
        %v552 = vadd.f32 0.0, %v551
        %v553 = vpop.f32.mrb[0].mxu0
        %554 = vdwg.mxu0
        %v555 = vmul.f32 %v552, 0.35355338
        %v556 = vsel %vm480, %v555, -inf
        %557 = vmax.xlane.f32.xlu0 %v556
        %v558 = vpop.xlane.xlu0 %557
        %v559 = vsub.f32 %v555, %v558
        %v560 = vmul.f32 %v559, 1.442695
        %v561 = vpow.pop %v560
        %v562 = vsel %vm480, %v561, 0.0
        %563 = vadd.xlane.f32.xlu0 %v562
        %v564 = vpop.xlane.xlu0 %563
        %v565 = vrcp.pop %v564
        %v566 = vmul.f32 %v561, %v565
        %567 = vrot.lane.b32.xlu0 %v474, 64
        %v568 = vpop.permute.xlu0 %567
        %v571 = vsel %vm480, %v566, 0
        %573 = vmatprep.subr.mxu0 0.0
        %574 = vmatpush1.msra.mxu0 %v568
        %575 = vmatprep.subr.mxu0 0.0
        %576 = vmatpush1.msra.mxu0 0.0
        %577 = vmatprep.subr.mxu0 0.0
        %578 = vmatpush1.msra.mxu0 0.0
        %579 = vmatprep.subr.mxu0 0.0
        %580 = vmatpush1.msra.mxu0 0.0
        %581 = vmatprep.subr.mxu0 0.0
        %582 = vmatpush1.msra.mxu0 0.0
        %583 = vmatprep.subr.mxu0 0.0
        %584 = vmatpush1.msra.mxu0 0.0
        %585 = vmatprep.subr.mxu0 0.0
        %586 = vmatpush1.msra.mxu0 0.0
        %587 = vmatprep.subr.mxu0 0.0
        %588 = vmatpush1.msra.mxu0 0.0
        %589 = vmatprep.subr.mxu0 0.0
        %590 = vmatpush1.msra.mxu0 0.0
        %591 = vmatprep.subr.mxu0 0.0
        %592 = vmatpush1.msra.mxu0 0.0
        %593 = vmatprep.subr.mxu0 0.0
        %594 = vmatpush1.msra.mxu0 0.0
        %595 = vmatprep.subr.mxu0 0.0
        %596 = vmatpush1.msra.mxu0 0.0
        %597 = vmatprep.subr.mxu0 0.0
        %598 = vmatpush1.msra.mxu0 0.0
        %599 = vmatprep.subr.mxu0 0.0
        %600 = vmatpush1.msra.mxu0 0.0
        %601 = vmatprep.subr.mxu0 0.0
        %602 = vmatpush1.msra.mxu0 0.0
        %603 = vmatprep.subr.mxu0 0.0
        %604 = vmatpush1.msra.mxu0 0.0
        %605 = vmatprep.subr.mxu0 0.0
        %606 = vmatpush1.msra.mxu0 0.0
        %607 = vmatprep.subr.mxu0 0.0
        %608 = vmatpush1.msra.mxu0 0.0
        %609 = vmatprep.subr.mxu0 0.0
        %610 = vmatpush1.msra.mxu0 0.0
        %611 = vmatprep.subr.mxu0 0.0
        %612 = vmatpush1.msra.mxu0 0.0
        %613 = vmatprep.subr.mxu0 0.0
        %614 = vmatpush1.msra.mxu0 0.0
        %615 = vmatprep.subr.mxu0 0.0
        %616 = vmatpush1.msra.mxu0 0.0
        %617 = vmatprep.subr.mxu0 0.0
        %618 = vmatpush1.msra.mxu0 0.0
        %619 = vmatprep.subr.mxu0 0.0
        %620 = vmatpush1.msra.mxu0 0.0
        %621 = vmatprep.subr.mxu0 0.0
        %622 = vmatpush1.msra.mxu0 0.0
        %623 = vmatprep.subr.mxu0 0.0
        %624 = vmatpush1.msra.mxu0 0.0
        %625 = vmatprep.subr.mxu0 0.0
        %626 = vmatpush1.msra.mxu0 0.0
        %627 = vmatprep.subr.mxu0 0.0
        %628 = vmatpush1.msra.mxu0 0.0
        %629 = vmatprep.subr.mxu0 0.0
        %630 = vmatpush1.msra.mxu0 0.0
        %631 = vmatprep.subr.mxu0 0.0
        %632 = vmatpush1.msra.mxu0 0.0
        %633 = vmatprep.subr.mxu0 0.0
        %634 = vmatpush1.msra.mxu0 0.0
        %635 = vmatprep.subr.mxu0 0.0
        %636 = vmatpush1.msra.mxu0 0.0
        %637 = vmatprep.mubr.f32.mxu0 0.0
        %638 = vmatmul.mubr.f32.gmra.mrb[0].mxu0 %v571
        %v639 = vpop.f32.mrb[0].mxu0
        %v640 = vadd.f32 0.0, %v639
        %v641 = vpop.f32.mrb[0].mxu0
        %642 = vdwg.mxu0
        %643 = vrot.lane.b32.xlu0 %v474, 120
        %v644 = vpop.permute.xlu0 %643
        %645 = vrot.lane.b32.xlu0 %v474, 88
        %v646 = vpop.permute.xlu0 %645
        %v647 = vsel %vm480, %v644, 0
        %v649 = vsel %vm480, %v646, 0
        %651 = vmatprep.subr.mxu0 0.0
        %652 = vmatpush1.xpose.msra.mxu0 %v649
        %653 = vmatprep.subr.mxu0 0.0
        %654 = vmatpush1.xpose.msra.mxu0 0.0
        %655 = vmatprep.subr.mxu0 0.0
        %656 = vmatpush1.xpose.msra.mxu0 0.0
        %657 = vmatprep.subr.mxu0 0.0
        %658 = vmatpush1.xpose.msra.mxu0 0.0
        %659 = vmatprep.subr.mxu0 0.0
        %660 = vmatpush1.xpose.msra.mxu0 0.0
        %661 = vmatprep.subr.mxu0 0.0
        %662 = vmatpush1.xpose.msra.mxu0 0.0
        %663 = vmatprep.subr.mxu0 0.0
        %664 = vmatpush1.xpose.msra.mxu0 0.0
        %665 = vmatprep.subr.mxu0 0.0
        %666 = vmatpush1.xpose.msra.mxu0 0.0
        %667 = vmatprep.subr.mxu0 0.0
        %668 = vmatpush1.xpose.msra.mxu0 0.0
        %669 = vmatprep.subr.mxu0 0.0
        %670 = vmatpush1.xpose.msra.mxu0 0.0
        %671 = vmatprep.subr.mxu0 0.0
        %672 = vmatpush1.xpose.msra.mxu0 0.0
        %673 = vmatprep.subr.mxu0 0.0
        %674 = vmatpush1.xpose.msra.mxu0 0.0
        %675 = vmatprep.subr.mxu0 0.0
        %676 = vmatpush1.xpose.msra.mxu0 0.0
        %677 = vmatprep.subr.mxu0 0.0
        %678 = vmatpush1.xpose.msra.mxu0 0.0
        %679 = vmatprep.subr.mxu0 0.0
        %680 = vmatpush1.xpose.msra.mxu0 0.0
        %681 = vmatprep.subr.mxu0 0.0
        %682 = vmatpush1.xpose.msra.mxu0 0.0
        %683 = vmatprep.subr.mxu0 0.0
        %684 = vmatpush1.xpose.msra.mxu0 0.0
        %685 = vmatprep.subr.mxu0 0.0
        %686 = vmatpush1.xpose.msra.mxu0 0.0
        %687 = vmatprep.subr.mxu0 0.0
        %688 = vmatpush1.xpose.msra.mxu0 0.0
        %689 = vmatprep.subr.mxu0 0.0
        %690 = vmatpush1.xpose.msra.mxu0 0.0
        %691 = vmatprep.subr.mxu0 0.0
        %692 = vmatpush1.xpose.msra.mxu0 0.0
        %693 = vmatprep.subr.mxu0 0.0
        %694 = vmatpush1.xpose.msra.mxu0 0.0
        %695 = vmatprep.subr.mxu0 0.0
        %696 = vmatpush1.xpose.msra.mxu0 0.0
        %697 = vmatprep.subr.mxu0 0.0
        %698 = vmatpush1.xpose.msra.mxu0 0.0
        %699 = vmatprep.subr.mxu0 0.0
        %700 = vmatpush1.xpose.msra.mxu0 0.0
        %701 = vmatprep.subr.mxu0 0.0
        %702 = vmatpush1.xpose.msra.mxu0 0.0
        %703 = vmatprep.subr.mxu0 0.0
        %704 = vmatpush1.xpose.msra.mxu0 0.0
        %705 = vmatprep.subr.mxu0 0.0
        %706 = vmatpush1.xpose.msra.mxu0 0.0
        %707 = vmatprep.subr.mxu0 0.0
        %708 = vmatpush1.xpose.msra.mxu0 0.0
        %709 = vmatprep.subr.mxu0 0.0
        %710 = vmatpush1.xpose.msra.mxu0 0.0
        %711 = vmatprep.subr.mxu0 0.0
        %712 = vmatpush1.xpose.msra.mxu0 0.0
        %713 = vmatprep.subr.mxu0 0.0
        %714 = vmatpush1.xpose.msra.mxu0 0.0
        %715 = vmatprep.mubr.f32.mxu0 0.0
        %716 = vmatmul.mubr.f32.gmra.mrb[0].mxu0 %v647
        %v717 = vpop.f32.mrb[0].mxu0
        %v718 = vadd.f32 0.0, %v717
        %v719 = vpop.f32.mrb[0].mxu0
        %720 = vdwg.mxu0
        %v721 = vmul.f32 %v718, 0.35355338
        %v722 = vsel %vm480, %v721, -inf
        %723 = vmax.xlane.f32.xlu0 %v722
        %v724 = vpop.xlane.xlu0 %723
        %v725 = vsub.f32 %v721, %v724
        %v726 = vmul.f32 %v725, 1.442695
        %v727 = vpow.pop %v726
        %v728 = vsel %vm480, %v727, 0.0
        %729 = vadd.xlane.f32.xlu0 %v728
        %v730 = vpop.xlane.xlu0 %729
        %v731 = vrcp.pop %v730
        %v732 = vmul.f32 %v727, %v731
        %733 = vrot.lane.b32.xlu0 %v474, 56
        %v734 = vpop.permute.xlu0 %733
        %v737 = vsel %vm480, %v732, 0
        %739 = vmatprep.subr.mxu0 0.0
        %740 = vmatpush1.msra.mxu0 %v734
        %741 = vmatprep.subr.mxu0 0.0
        %742 = vmatpush1.msra.mxu0 0.0
        %743 = vmatprep.subr.mxu0 0.0
        %744 = vmatpush1.msra.mxu0 0.0
        %745 = vmatprep.subr.mxu0 0.0
        %746 = vmatpush1.msra.mxu0 0.0
        %747 = vmatprep.subr.mxu0 0.0
        %748 = vmatpush1.msra.mxu0 0.0
        %749 = vmatprep.subr.mxu0 0.0
        %750 = vmatpush1.msra.mxu0 0.0
        %751 = vmatprep.subr.mxu0 0.0
        %752 = vmatpush1.msra.mxu0 0.0
        %753 = vmatprep.subr.mxu0 0.0
        %754 = vmatpush1.msra.mxu0 0.0
        %755 = vmatprep.subr.mxu0 0.0
        %756 = vmatpush1.msra.mxu0 0.0
        %757 = vmatprep.subr.mxu0 0.0
        %758 = vmatpush1.msra.mxu0 0.0
        %759 = vmatprep.subr.mxu0 0.0
        %760 = vmatpush1.msra.mxu0 0.0
        %761 = vmatprep.subr.mxu0 0.0
        %762 = vmatpush1.msra.mxu0 0.0
        %763 = vmatprep.subr.mxu0 0.0
        %764 = vmatpush1.msra.mxu0 0.0
        %765 = vmatprep.subr.mxu0 0.0
        %766 = vmatpush1.msra.mxu0 0.0
        %767 = vmatprep.subr.mxu0 0.0
        %768 = vmatpush1.msra.mxu0 0.0
        %769 = vmatprep.subr.mxu0 0.0
        %770 = vmatpush1.msra.mxu0 0.0
        %771 = vmatprep.subr.mxu0 0.0
        %772 = vmatpush1.msra.mxu0 0.0
        %773 = vmatprep.subr.mxu0 0.0
        %774 = vmatpush1.msra.mxu0 0.0
        %775 = vmatprep.subr.mxu0 0.0
        %776 = vmatpush1.msra.mxu0 0.0
        %777 = vmatprep.subr.mxu0 0.0
        %778 = vmatpush1.msra.mxu0 0.0
        %779 = vmatprep.subr.mxu0 0.0
        %780 = vmatpush1.msra.mxu0 0.0
        %781 = vmatprep.subr.mxu0 0.0
        %782 = vmatpush1.msra.mxu0 0.0
        %783 = vmatprep.subr.mxu0 0.0
        %784 = vmatpush1.msra.mxu0 0.0
        %785 = vmatprep.subr.mxu0 0.0
        %786 = vmatpush1.msra.mxu0 0.0
        %787 = vmatprep.subr.mxu0 0.0
        %788 = vmatpush1.msra.mxu0 0.0
        %789 = vmatprep.subr.mxu0 0.0
        %790 = vmatpush1.msra.mxu0 0.0
        %791 = vmatprep.subr.mxu0 0.0
        %792 = vmatpush1.msra.mxu0 0.0
        %793 = vmatprep.subr.mxu0 0.0
        %794 = vmatpush1.msra.mxu0 0.0
        %795 = vmatprep.subr.mxu0 0.0
        %796 = vmatpush1.msra.mxu0 0.0
        %797 = vmatprep.subr.mxu0 0.0
        %798 = vmatpush1.msra.mxu0 0.0
        %799 = vmatprep.subr.mxu0 0.0
        %800 = vmatpush1.msra.mxu0 0.0
        %801 = vmatprep.subr.mxu0 0.0
        %802 = vmatpush1.msra.mxu0 0.0
        %803 = vmatprep.mubr.f32.mxu0 0.0
        %804 = vmatmul.mubr.f32.gmra.mrb[0].mxu0 %v737
        %v805 = vpop.f32.mrb[0].mxu0
        %v806 = vadd.f32 0.0, %v805
        %v807 = vpop.f32.mrb[0].mxu0
        %808 = vdwg.mxu0
        %809 = vrot.lane.b32.xlu0 %v474, 112
        %v810 = vpop.permute.xlu0 %809
        %811 = vrot.lane.b32.xlu0 %v474, 80
        %v812 = vpop.permute.xlu0 %811
        %v813 = vsel %vm480, %v810, 0
        %v815 = vsel %vm480, %v812, 0
        %817 = vmatprep.subr.mxu0 0.0
        %818 = vmatpush1.xpose.msra.mxu0 %v815
        %819 = vmatprep.subr.mxu0 0.0
        %820 = vmatpush1.xpose.msra.mxu0 0.0
        %821 = vmatprep.subr.mxu0 0.0
        %822 = vmatpush1.xpose.msra.mxu0 0.0
        %823 = vmatprep.subr.mxu0 0.0
        %824 = vmatpush1.xpose.msra.mxu0 0.0
        %825 = vmatprep.subr.mxu0 0.0
        %826 = vmatpush1.xpose.msra.mxu0 0.0
        %827 = vmatprep.subr.mxu0 0.0
        %828 = vmatpush1.xpose.msra.mxu0 0.0
        %829 = vmatprep.subr.mxu0 0.0
        %830 = vmatpush1.xpose.msra.mxu0 0.0
        %831 = vmatprep.subr.mxu0 0.0
        %832 = vmatpush1.xpose.msra.mxu0 0.0
        %833 = vmatprep.subr.mxu0 0.0
        %834 = vmatpush1.xpose.msra.mxu0 0.0
        %835 = vmatprep.subr.mxu0 0.0
        %836 = vmatpush1.xpose.msra.mxu0 0.0
        %837 = vmatprep.subr.mxu0 0.0
        %838 = vmatpush1.xpose.msra.mxu0 0.0
        %839 = vmatprep.subr.mxu0 0.0
        %840 = vmatpush1.xpose.msra.mxu0 0.0
        %841 = vmatprep.subr.mxu0 0.0
        %842 = vmatpush1.xpose.msra.mxu0 0.0
        %843 = vmatprep.subr.mxu0 0.0
        %844 = vmatpush1.xpose.msra.mxu0 0.0
        %845 = vmatprep.subr.mxu0 0.0
        %846 = vmatpush1.xpose.msra.mxu0 0.0
        %847 = vmatprep.subr.mxu0 0.0
        %848 = vmatpush1.xpose.msra.mxu0 0.0
        %849 = vmatprep.subr.mxu0 0.0
        %850 = vmatpush1.xpose.msra.mxu0 0.0
        %851 = vmatprep.subr.mxu0 0.0
        %852 = vmatpush1.xpose.msra.mxu0 0.0
        %853 = vmatprep.subr.mxu0 0.0
        %854 = vmatpush1.xpose.msra.mxu0 0.0
        %855 = vmatprep.subr.mxu0 0.0
        %856 = vmatpush1.xpose.msra.mxu0 0.0
        %857 = vmatprep.subr.mxu0 0.0
        %858 = vmatpush1.xpose.msra.mxu0 0.0
        %859 = vmatprep.subr.mxu0 0.0
        %860 = vmatpush1.xpose.msra.mxu0 0.0
        %861 = vmatprep.subr.mxu0 0.0
        %862 = vmatpush1.xpose.msra.mxu0 0.0
        %863 = vmatprep.subr.mxu0 0.0
        %864 = vmatpush1.xpose.msra.mxu0 0.0
        %865 = vmatprep.subr.mxu0 0.0
        %866 = vmatpush1.xpose.msra.mxu0 0.0
        %867 = vmatprep.subr.mxu0 0.0
        %868 = vmatpush1.xpose.msra.mxu0 0.0
        %869 = vmatprep.subr.mxu0 0.0
        %870 = vmatpush1.xpose.msra.mxu0 0.0
        %871 = vmatprep.subr.mxu0 0.0
        %872 = vmatpush1.xpose.msra.mxu0 0.0
        %873 = vmatprep.subr.mxu0 0.0
        %874 = vmatpush1.xpose.msra.mxu0 0.0
        %875 = vmatprep.subr.mxu0 0.0
        %876 = vmatpush1.xpose.msra.mxu0 0.0
        %877 = vmatprep.subr.mxu0 0.0
        %878 = vmatpush1.xpose.msra.mxu0 0.0
        %879 = vmatprep.subr.mxu0 0.0
        %880 = vmatpush1.xpose.msra.mxu0 0.0
        %881 = vmatprep.mubr.f32.mxu0 0.0
        %882 = vmatmul.mubr.f32.gmra.mrb[0].mxu0 %v813
        %v883 = vpop.f32.mrb[0].mxu0
        %v884 = vadd.f32 0.0, %v883
        %v885 = vpop.f32.mrb[0].mxu0
        %886 = vdwg.mxu0
        %v887 = vmul.f32 %v884, 0.35355338
        %v888 = vsel %vm480, %v887, -inf
        %889 = vmax.xlane.f32.xlu0 %v888
        %v890 = vpop.xlane.xlu0 %889
        %v891 = vsub.f32 %v887, %v890
        %v892 = vmul.f32 %v891, 1.442695
        %v893 = vpow.pop %v892
        %v894 = vsel %vm480, %v893, 0.0
        %895 = vadd.xlane.f32.xlu0 %v894
        %v896 = vpop.xlane.xlu0 %895
        %v897 = vrcp.pop %v896
        %v898 = vmul.f32 %v893, %v897
        %899 = vrot.lane.b32.xlu0 %v474, 48
        %v900 = vpop.permute.xlu0 %899
        %v903 = vsel %vm480, %v898, 0
        %905 = vmatprep.subr.mxu0 0.0
        %906 = vmatpush1.msra.mxu0 %v900
        %907 = vmatprep.subr.mxu0 0.0
        %908 = vmatpush1.msra.mxu0 0.0
        %909 = vmatprep.subr.mxu0 0.0
        %910 = vmatpush1.msra.mxu0 0.0
        %911 = vmatprep.subr.mxu0 0.0
        %912 = vmatpush1.msra.mxu0 0.0
        %913 = vmatprep.subr.mxu0 0.0
        %914 = vmatpush1.msra.mxu0 0.0
        %915 = vmatprep.subr.mxu0 0.0
        %916 = vmatpush1.msra.mxu0 0.0
        %917 = vmatprep.subr.mxu0 0.0
        %918 = vmatpush1.msra.mxu0 0.0
        %919 = vmatprep.subr.mxu0 0.0
        %920 = vmatpush1.msra.mxu0 0.0
        %921 = vmatprep.subr.mxu0 0.0
        %922 = vmatpush1.msra.mxu0 0.0
        %923 = vmatprep.subr.mxu0 0.0
        %924 = vmatpush1.msra.mxu0 0.0
        %925 = vmatprep.subr.mxu0 0.0
        %926 = vmatpush1.msra.mxu0 0.0
        %927 = vmatprep.subr.mxu0 0.0
        %928 = vmatpush1.msra.mxu0 0.0
        %929 = vmatprep.subr.mxu0 0.0
        %930 = vmatpush1.msra.mxu0 0.0
        %931 = vmatprep.subr.mxu0 0.0
        %932 = vmatpush1.msra.mxu0 0.0
        %933 = vmatprep.subr.mxu0 0.0
        %934 = vmatpush1.msra.mxu0 0.0
        %935 = vmatprep.subr.mxu0 0.0
        %936 = vmatpush1.msra.mxu0 0.0
        %937 = vmatprep.subr.mxu0 0.0
        %938 = vmatpush1.msra.mxu0 0.0
        %939 = vmatprep.subr.mxu0 0.0
        %940 = vmatpush1.msra.mxu0 0.0
        %941 = vmatprep.subr.mxu0 0.0
        %942 = vmatpush1.msra.mxu0 0.0
        %943 = vmatprep.subr.mxu0 0.0
        %944 = vmatpush1.msra.mxu0 0.0
        %945 = vmatprep.subr.mxu0 0.0
        %946 = vmatpush1.msra.mxu0 0.0
        %947 = vmatprep.subr.mxu0 0.0
        %948 = vmatpush1.msra.mxu0 0.0
        %949 = vmatprep.subr.mxu0 0.0
        %950 = vmatpush1.msra.mxu0 0.0
        %951 = vmatprep.subr.mxu0 0.0
        %952 = vmatpush1.msra.mxu0 0.0
        %953 = vmatprep.subr.mxu0 0.0
        %954 = vmatpush1.msra.mxu0 0.0
        %955 = vmatprep.subr.mxu0 0.0
        %956 = vmatpush1.msra.mxu0 0.0
        %957 = vmatprep.subr.mxu0 0.0
        %958 = vmatpush1.msra.mxu0 0.0
        %959 = vmatprep.subr.mxu0 0.0
        %960 = vmatpush1.msra.mxu0 0.0
        %961 = vmatprep.subr.mxu0 0.0
        %962 = vmatpush1.msra.mxu0 0.0
        %963 = vmatprep.subr.mxu0 0.0
        %964 = vmatpush1.msra.mxu0 0.0
        %965 = vmatprep.subr.mxu0 0.0
        %966 = vmatpush1.msra.mxu0 0.0
        %967 = vmatprep.subr.mxu0 0.0
        %968 = vmatpush1.msra.mxu0 0.0
        %969 = vmatprep.mubr.f32.mxu0 0.0
        %970 = vmatmul.mubr.f32.gmra.mrb[0].mxu0 %v903
        %v971 = vpop.f32.mrb[0].mxu0
        %v972 = vadd.f32 0.0, %v971
        %v973 = vpop.f32.mrb[0].mxu0
        %974 = vdwg.mxu0
        %975 = vrot.lane.b32.xlu0 %v474, 104
        %v976 = vpop.permute.xlu0 %975
        %977 = vrot.lane.b32.xlu0 %v474, 72
        %v978 = vpop.permute.xlu0 %977
        %v979 = vsel %vm480, %v976, 0
        %v981 = vsel %vm480, %v978, 0
        %983 = vmatprep.subr.mxu0 0.0
        %984 = vmatpush1.xpose.msra.mxu0 %v981
        %985 = vmatprep.subr.mxu0 0.0
        %986 = vmatpush1.xpose.msra.mxu0 0.0
        %987 = vmatprep.subr.mxu0 0.0
        %988 = vmatpush1.xpose.msra.mxu0 0.0
        %989 = vmatprep.subr.mxu0 0.0
        %990 = vmatpush1.xpose.msra.mxu0 0.0
        %991 = vmatprep.subr.mxu0 0.0
        %992 = vmatpush1.xpose.msra.mxu0 0.0
        %993 = vmatprep.subr.mxu0 0.0
        %994 = vmatpush1.xpose.msra.mxu0 0.0
        %995 = vmatprep.subr.mxu0 0.0
        %996 = vmatpush1.xpose.msra.mxu0 0.0
        %997 = vmatprep.subr.mxu0 0.0
        %998 = vmatpush1.xpose.msra.mxu0 0.0
        %999 = vmatprep.subr.mxu0 0.0
        %1000 = vmatpush1.xpose.msra.mxu0 0.0
        %1001 = vmatprep.subr.mxu0 0.0
        %1002 = vmatpush1.xpose.msra.mxu0 0.0
        %1003 = vmatprep.subr.mxu0 0.0
        %1004 = vmatpush1.xpose.msra.mxu0 0.0
        %1005 = vmatprep.subr.mxu0 0.0
        %1006 = vmatpush1.xpose.msra.mxu0 0.0
        %1007 = vmatprep.subr.mxu0 0.0
        %1008 = vmatpush1.xpose.msra.mxu0 0.0
        %1009 = vmatprep.subr.mxu0 0.0
        %1010 = vmatpush1.xpose.msra.mxu0 0.0
        %1011 = vmatprep.subr.mxu0 0.0
        %1012 = vmatpush1.xpose.msra.mxu0 0.0
        %1013 = vmatprep.subr.mxu0 0.0
        %1014 = vmatpush1.xpose.msra.mxu0 0.0
        %1015 = vmatprep.subr.mxu0 0.0
        %1016 = vmatpush1.xpose.msra.mxu0 0.0
        %1017 = vmatprep.subr.mxu0 0.0
        %1018 = vmatpush1.xpose.msra.mxu0 0.0
        %1019 = vmatprep.subr.mxu0 0.0
        %1020 = vmatpush1.xpose.msra.mxu0 0.0
        %1021 = vmatprep.subr.mxu0 0.0
        %1022 = vmatpush1.xpose.msra.mxu0 0.0
        %1023 = vmatprep.subr.mxu0 0.0
        %1024 = vmatpush1.xpose.msra.mxu0 0.0
        %1025 = vmatprep.subr.mxu0 0.0
        %1026 = vmatpush1.xpose.msra.mxu0 0.0
        %1027 = vmatprep.subr.mxu0 0.0
        %1028 = vmatpush1.xpose.msra.mxu0 0.0
        %1029 = vmatprep.subr.mxu0 0.0
        %1030 = vmatpush1.xpose.msra.mxu0 0.0
        %1031 = vmatprep.subr.mxu0 0.0
        %1032 = vmatpush1.xpose.msra.mxu0 0.0
        %1033 = vmatprep.subr.mxu0 0.0
        %1034 = vmatpush1.xpose.msra.mxu0 0.0
        %1035 = vmatprep.subr.mxu0 0.0
        %1036 = vmatpush1.xpose.msra.mxu0 0.0
        %1037 = vmatprep.subr.mxu0 0.0
        %1038 = vmatpush1.xpose.msra.mxu0 0.0
        %1039 = vmatprep.subr.mxu0 0.0
        %1040 = vmatpush1.xpose.msra.mxu0 0.0
        %1041 = vmatprep.subr.mxu0 0.0
        %1042 = vmatpush1.xpose.msra.mxu0 0.0
        %1043 = vmatprep.subr.mxu0 0.0
        %1044 = vmatpush1.xpose.msra.mxu0 0.0
        %1045 = vmatprep.subr.mxu0 0.0
        %1046 = vmatpush1.xpose.msra.mxu0 0.0
        %1047 = vmatprep.mubr.f32.mxu0 0.0
        %1048 = vmatmul.mubr.f32.gmra.mrb[0].mxu0 %v979
        %v1049 = vpop.f32.mrb[0].mxu0
        %v1050 = vadd.f32 0.0, %v1049
        %v1051 = vpop.f32.mrb[0].mxu0
        %1052 = vdwg.mxu0
        %v1053 = vmul.f32 %v1050, 0.35355338
        %v1054 = vsel %vm480, %v1053, -inf
        %1055 = vmax.xlane.f32.xlu0 %v1054
        %v1056 = vpop.xlane.xlu0 %1055
        %v1057 = vsub.f32 %v1053, %v1056
        %v1058 = vmul.f32 %v1057, 1.442695
        %v1059 = vpow.pop %v1058
        %v1060 = vsel %vm480, %v1059, 0.0
        %1061 = vadd.xlane.f32.xlu0 %v1060
        %v1062 = vpop.xlane.xlu0 %1061
        %v1063 = vrcp.pop %v1062
        %v1064 = vmul.f32 %v1059, %v1063
        %1065 = vrot.lane.b32.xlu0 %v474, 40
        %v1066 = vpop.permute.xlu0 %1065
        %v1069 = vsel %vm480, %v1064, 0
        %1071 = vmatprep.subr.mxu0 0.0
        %1072 = vmatpush1.msra.mxu0 %v1066
        %1073 = vmatprep.subr.mxu0 0.0
        %1074 = vmatpush1.msra.mxu0 0.0
        %1075 = vmatprep.subr.mxu0 0.0
        %1076 = vmatpush1.msra.mxu0 0.0
        %1077 = vmatprep.subr.mxu0 0.0
        %1078 = vmatpush1.msra.mxu0 0.0
        %1079 = vmatprep.subr.mxu0 0.0
        %1080 = vmatpush1.msra.mxu0 0.0
        %1081 = vmatprep.subr.mxu0 0.0
        %1082 = vmatpush1.msra.mxu0 0.0
        %1083 = vmatprep.subr.mxu0 0.0
        %1084 = vmatpush1.msra.mxu0 0.0
        %1085 = vmatprep.subr.mxu0 0.0
        %1086 = vmatpush1.msra.mxu0 0.0
        %1087 = vmatprep.subr.mxu0 0.0
        %1088 = vmatpush1.msra.mxu0 0.0
        %1089 = vmatprep.subr.mxu0 0.0
        %1090 = vmatpush1.msra.mxu0 0.0
        %1091 = vmatprep.subr.mxu0 0.0
        %1092 = vmatpush1.msra.mxu0 0.0
        %1093 = vmatprep.subr.mxu0 0.0
        %1094 = vmatpush1.msra.mxu0 0.0
        %1095 = vmatprep.subr.mxu0 0.0
        %1096 = vmatpush1.msra.mxu0 0.0
        %1097 = vmatprep.subr.mxu0 0.0
        %1098 = vmatpush1.msra.mxu0 0.0
        %1099 = vmatprep.subr.mxu0 0.0
        %1100 = vmatpush1.msra.mxu0 0.0
        %1101 = vmatprep.subr.mxu0 0.0
        %1102 = vmatpush1.msra.mxu0 0.0
        %1103 = vmatprep.subr.mxu0 0.0
        %1104 = vmatpush1.msra.mxu0 0.0
        %1105 = vmatprep.subr.mxu0 0.0
        %1106 = vmatpush1.msra.mxu0 0.0
        %1107 = vmatprep.subr.mxu0 0.0
        %1108 = vmatpush1.msra.mxu0 0.0
        %1109 = vmatprep.subr.mxu0 0.0
        %1110 = vmatpush1.msra.mxu0 0.0
        %1111 = vmatprep.subr.mxu0 0.0
        %1112 = vmatpush1.msra.mxu0 0.0
        %1113 = vmatprep.subr.mxu0 0.0
        %1114 = vmatpush1.msra.mxu0 0.0
        %1115 = vmatprep.subr.mxu0 0.0
        %1116 = vmatpush1.msra.mxu0 0.0
        %1117 = vmatprep.subr.mxu0 0.0
        %1118 = vmatpush1.msra.mxu0 0.0
        %1119 = vmatprep.subr.mxu0 0.0
        %1120 = vmatpush1.msra.mxu0 0.0
        %1121 = vmatprep.subr.mxu0 0.0
        %1122 = vmatpush1.msra.mxu0 0.0
        %1123 = vmatprep.subr.mxu0 0.0
        %1124 = vmatpush1.msra.mxu0 0.0
        %1125 = vmatprep.subr.mxu0 0.0
        %1126 = vmatpush1.msra.mxu0 0.0
        %1127 = vmatprep.subr.mxu0 0.0
        %1128 = vmatpush1.msra.mxu0 0.0
        %1129 = vmatprep.subr.mxu0 0.0
        %1130 = vmatpush1.msra.mxu0 0.0
        %1131 = vmatprep.subr.mxu0 0.0
        %1132 = vmatpush1.msra.mxu0 0.0
        %1133 = vmatprep.subr.mxu0 0.0
        %1134 = vmatpush1.msra.mxu0 0.0
        %1135 = vmatprep.mubr.f32.mxu0 0.0
        %1136 = vmatmul.mubr.f32.gmra.mrb[0].mxu0 %v1069
        %v1137 = vpop.f32.mrb[0].mxu0
        %v1138 = vadd.f32 0.0, %v1137
        %v1139 = vpop.f32.mrb[0].mxu0
        %1140 = vdwg.mxu0
        %1141 = vst.msk [vmem:[%s360] sm:$0xff] %vm480, %v566
        %1142 = vst.msk [vmem:[%s360 + $0x8] sm:$0xff] %vm480, %v732
        %1143 = vst.msk [vmem:[%s360 + $0x10] sm:$0xff] %vm480, %v898
        %1144 = vst.msk [vmem:[%s360 + $0x18] sm:$0xff] %vm480, %v1064
        %1146 = vrot.lane.b32.xlu0 %v806, 8
        %v1147 = vpop.permute.xlu0 %1146
        %1150 = vrot.lane.b32.xlu0 %v972, 16
        %v1151 = vpop.permute.xlu0 %1150
        %1154 = vrot.lane.b32.xlu0 %v1138, 24
        %v1155 = vpop.permute.xlu0 %1154
        %v1157 = vsel %vm480, %v640, %v1147
        %vm1158 = vcmask 130048
        %v1159 = vsel %vm1158, %v1157, %v1151
        %vm1160 = vcmask 195584
        %v1161 = vsel %vm1160, %v1159, %v1155
        %v1162 = vld [vmem:[#allocation7] sm:$0xff]
        %v1163 = vld [vmem:[#allocation7 + $0x8] sm:$0xff]
        %v1164 = vld [vmem:[#allocation7 + $0x10] sm:$0xff]
        %v1165 = vld [vmem:[#allocation7 + $0x18] sm:$0xff]
        %v1166 = vld [vmem:[%s6] sm:$0x1]
        %v1168 = vlaneseq
        %v1169 = vshrl.u32 %v1168, 7
        %v1170 = vsub.s32 0, %v1169
        %v1171 = vrot.slane %v1166, %v1170
        %v1174 = vsel %vm364, %v1161, 0
        %1176 = vmatprep.subr.mxu0 0.0
        %1177 = vmatpush1.msra.mxu0 %v1162
        %1178 = vmatprep.subr.mxu0 0.0
        %1179 = vmatpush1.msra.mxu0 %v1163
        %1180 = vmatprep.subr.mxu0 0.0
        %1181 = vmatpush1.msra.mxu0 %v1164
        %1182 = vmatprep.subr.mxu0 0.0
        %1183 = vmatpush1.msra.mxu0 %v1165
        %1184 = vmatprep.subr.mxu0 0.0
        %1185 = vmatpush1.msra.mxu0 0.0
        %1186 = vmatprep.subr.mxu0 0.0
        %1187 = vmatpush1.msra.mxu0 0.0
        %1188 = vmatprep.subr.mxu0 0.0
        %1189 = vmatpush1.msra.mxu0 0.0
        %1190 = vmatprep.subr.mxu0 0.0
        %1191 = vmatpush1.msra.mxu0 0.0
        %1192 = vmatprep.subr.mxu0 0.0
        %1193 = vmatpush1.msra.mxu0 0.0
        %1194 = vmatprep.subr.mxu0 0.0
        %1195 = vmatpush1.msra.mxu0 0.0
        %1196 = vmatprep.subr.mxu0 0.0
        %1197 = vmatpush1.msra.mxu0 0.0
        %1198 = vmatprep.subr.mxu0 0.0
        %1199 = vmatpush1.msra.mxu0 0.0
        %1200 = vmatprep.subr.mxu0 0.0
        %1201 = vmatpush1.msra.mxu0 0.0
        %1202 = vmatprep.subr.mxu0 0.0
        %1203 = vmatpush1.msra.mxu0 0.0
        %1204 = vmatprep.subr.mxu0 0.0
        %1205 = vmatpush1.msra.mxu0 0.0
        %1206 = vmatprep.subr.mxu0 0.0
        %1207 = vmatpush1.msra.mxu0 0.0
        %1208 = vmatprep.subr.mxu0 0.0
        %1209 = vmatpush1.msra.mxu0 0.0
        %1210 = vmatprep.subr.mxu0 0.0
        %1211 = vmatpush1.msra.mxu0 0.0
        %1212 = vmatprep.subr.mxu0 0.0
        %1213 = vmatpush1.msra.mxu0 0.0
        %1214 = vmatprep.subr.mxu0 0.0
        %1215 = vmatpush1.msra.mxu0 0.0
        %1216 = vmatprep.subr.mxu0 0.0
        %1217 = vmatpush1.msra.mxu0 0.0
        %1218 = vmatprep.subr.mxu0 0.0
        %1219 = vmatpush1.msra.mxu0 0.0
        %1220 = vmatprep.subr.mxu0 0.0
        %1221 = vmatpush1.msra.mxu0 0.0
        %1222 = vmatprep.subr.mxu0 0.0
        %1223 = vmatpush1.msra.mxu0 0.0
        %1224 = vmatprep.subr.mxu0 0.0
        %1225 = vmatpush1.msra.mxu0 0.0
        %1226 = vmatprep.subr.mxu0 0.0
        %1227 = vmatpush1.msra.mxu0 0.0
        %1228 = vmatprep.subr.mxu0 0.0
        %1229 = vmatpush1.msra.mxu0 0.0
        %1230 = vmatprep.subr.mxu0 0.0
        %1231 = vmatpush1.msra.mxu0 0.0
        %1232 = vmatprep.subr.mxu0 0.0
        %1233 = vmatpush1.msra.mxu0 0.0
        %1234 = vmatprep.subr.mxu0 0.0
        %1235 = vmatpush1.msra.mxu0 0.0
        %1236 = vmatprep.subr.mxu0 0.0
        %1237 = vmatpush1.msra.mxu0 0.0
        %1238 = vmatprep.subr.mxu0 0.0
        %1239 = vmatpush1.msra.mxu0 0.0
        %1240 = vmatprep.mubr.f32.mxu0 0.0
        %1241 = vmatmul.mubr.f32.gmra.mrb[0].mxu0 %v1174
        %v1242 = vpop.f32.mrb[0].mxu0
        %v1243 = vadd.f32 %v1171, %v1242
        %v1244 = vpop.f32.mrb[0].mxu0
        %1245 = vdwg.mxu0
        %v1246 = vadd.f32 %v1243, %v361
        %1247 = vst.msk [vmem:[%s353] sm:$0xff] %vm364, %v1246
        %s1248 = sand.u32 %s190, 1
        %s1249 = scalar_lea.sflag [#allocation4], %s1248
        %s1250 = sand.u32 %s190, 1
        %s1251 = smul.addr %s1250, 8
        %s1252 = scalar_lea.vmem [#allocation8], %s1251
        %s1253 = sand.u32 %s216, 1
        %s1254 = scalar_lea.sflag [#allocation10], %s1253
        %s1255 = sand.u32 %s216, 1
        %s1256 = smul.addr %s1255, 32
        %s1257 = scalar_lea.vmem [#allocation9], %s1256
        // Predicated region
        $region61: #{tpu_custom_call.1} parent=47 // pred_check
          %p1258 = pneg %p200
        $region62: #{tpu_custom_call.1} parent=47 // pred_check_branch
          %1260 = sbr.rel (%p1258) target = $region64
        $region63: #{tpu_custom_call.1} parent=47 // pred_region
          %s1262 = ssub.s32 128, 128
          %1263 = vsyncadd %s1249, %s1262
          %s1264 = smul.addr %s30, 128
          %s1265 = scalar_lea.hbm %s7, %s1264
          %s1267 = sshll.u32 %s1252, 4
          %s1268 = int_to_ptr.vmem [resolvable:$true] %s1267
          %1270 = dma.vmem_to_hbm [thread:$0]  %s1268, 128, %s1265, %s1249
        $region64: #{tpu_custom_call.1} parent=47 // pred_fallthru
          _
        // Predicated region
        $region65: #{tpu_custom_call.1} parent=47 // pred_check
          %p1271 = pneg %p226
        $region66: #{tpu_custom_call.1} parent=47 // pred_check_branch
          %1273 = sbr.rel (%p1271) target = $region68
        $region67: #{tpu_custom_call.1} parent=47 // pred_region
          %s1275 = ssub.s32 512, 512
          %1276 = vsyncadd %s1254, %s1275
          %s1277 = smul.addr %s30, 4
          %s1278 = smul.addr %s1277, 128
          %s1279 = scalar_lea.hbm %s8, %s1278
          %s1280 = sshll.u32 %s1257, 4
          %s1281 = int_to_ptr.vmem [resolvable:$true] %s1280
          %1286 = dma.vmem_to_hbm [thread:$0]  %s1281, 512, %s1279, %s1254, 128, 128, 8
        $region68: #{tpu_custom_call.1} parent=47 // pred_fallthru
          _
      $region48: #{tpu_custom_call.1} parent=5 // pred_fallthru
        _
      %p1287 = scmp.le.s32.totalorder 2, %s25
      // Predicated region
      $region69: #{tpu_custom_call.1} parent=5 // pred_check
        %p1288 = pneg %p1287
      $region70: #{tpu_custom_call.1} parent=5 // pred_check_branch
        %1290 = sbr.rel (%p1288) target = $region72
      $region71: #{tpu_custom_call.1} parent=5 // pred_region
        %s1291 = ssub.s32 %s25, 2
        // Predicated region
        $region73: #{tpu_custom_call.1} parent=71 // pred_check
          %p1292 = pneg %p206
        $region74: #{tpu_custom_call.1} parent=71 // pred_check_branch
          %1294 = sbr.rel (%p1292) target = $region76
        $region75: #{tpu_custom_call.1} parent=71 // pred_region
          %s1295 = sand.u32 %s191, 1
          %s1296 = scalar_lea.sflag [#allocation4], %s1295
          %s1297 = sand.u32 %s191, 1
          %s1298 = smul.addr %s1297, 8
          %s1299 = scalar_lea.vmem [#allocation8], %s1298
          %1300 = dma.done %s1296, 128
        $region76: #{tpu_custom_call.1} parent=71 // pred_fallthru
          _
        // Predicated region
        $region77: #{tpu_custom_call.1} parent=71 // pred_check
          %p1301 = pneg %p232
        $region78: #{tpu_custom_call.1} parent=71 // pred_check_branch
          %1303 = sbr.rel (%p1301) target = $region80
        $region79: #{tpu_custom_call.1} parent=71 // pred_region
          %s1304 = sand.u32 %s217, 1
          %s1305 = scalar_lea.sflag [#allocation10], %s1304
          %s1306 = sand.u32 %s217, 1
          %s1307 = smul.addr %s1306, 32
          %s1308 = scalar_lea.vmem [#allocation9], %s1307
          %1309 = dma.done %s1305, 512
        $region80: #{tpu_custom_call.1} parent=71 // pred_fallthru
          _
      $region72: #{tpu_custom_call.1} parent=5 // pred_fallthru
        _
    $region6: #{tpu_custom_call.1} parent=1 // loop_footer
      %s29 = sadd.s32 1, %s25
    $region7: #{tpu_custom_call.1} parent=1 // loop_footer_branch
      %24 = sbr.rel target = $region3
    $region8: #{tpu_custom_call.1} parent=1 // loop_exit
      _
    %1310 = vsyncpa [#allocation3], 1
    %s1311 = scalar_lea.sflag [#allocation3], 1
    %1312 = vsyncpa %s1311, 1
    %1313 = vsyncpa [#allocation6], 1
    %1314 = vsyncpa [#allocation4], 1
    %s1315 = scalar_lea.sflag [#allocation4], 1
    %1316 = vsyncpa %s1315, 1
    %1317 = vsyncpa [#allocation10], 1
    %s1318 = scalar_lea.sflag [#allocation10], 1
    %1319 = vsyncpa %s1318, 1

</llo_original>
